<compile_context>
chip_gen: v5e
topology: v5e:2x2
jax: 0.10.0
libtpu: 0.0.40
codegen_flags: <defaults>
</compile_context>

<pallas_src>
import functools

import jax
import jax.numpy as jnp
from jax import lax
from jax.experimental import pallas as pl
from jax.experimental.pallas import tpu as pltpu

BN_EPS = 1e-5


def _conv_bn_kernel(x_ref, w_ref, mask_ref, gb_ref, o_ref, acc_ref, *,
                    W, kh, kw, E, M_pad, M_valid):
    k = pl.program_id(0)

    @pl.when(k == 0)
    def _():
        acc_ref[...] = jnp.zeros_like(acc_ref)

    # ---- conv, fused im2col: one full-width MXU matmul per K-tile ----
    # x tile [M_pad, TK] bf16  @  tap-concatenated weights [TK, kh*kw*E] bf16 -> f32.
    y = jnp.dot(x_ref[...], w_ref[...], preferred_element_type=jnp.float32)

    # Gather tap contributions: lane-aligned E-wide column slices of the f32 result,
    # shifted along rows with the XLU (pltpu.roll).  out[m] needs tap value at row
    # m + shift; wrap-around rows land only on invalid (masked) rows by construction.
    part = y[:, 0:E]                                     # tap (0,0): shift 0
    for t in range(1, kh * kw):
        ki, kj = divmod(t, kw)
        shift = ki * W + kj                              # static per unrolled tap
        part = part + pltpu.roll(y[:, t * E:(t + 1) * E], M_pad - shift, axis=0)
    acc_ref[...] += part

    # ---- finalize: training-mode BatchNorm2d over the valid rows only ----
    @pl.when(k == pl.num_programs(0) - 1)
    def _():
        acc = acc_ref[...]                               # [M_pad, E] f32
        mask = mask_ref[...]                             # [M_pad, 1] f32 (0/1)
        am = acc * mask
        s1 = jnp.sum(am, axis=0, keepdims=True)          # Σ y        (1, E)
        s2 = jnp.sum(am * acc, axis=0, keepdims=True)    # Σ y²       (1, E)
        mean = s1 / M_valid
        var = s2 / M_valid - mean * mean                 # biased var (one-pass)
        inv = lax.rsqrt(var + BN_EPS)

        gamma = gb_ref[0:1, :]
        beta = gb_ref[1:2, :]
        scale = gamma * inv                              # (1, E)
        offset = beta - mean * scale                     # (1, E)
        # Full-slab store (invalid rows hold garbage; wrapper drops them).
        o_ref[...] = acc * scale + offset


def encoder_head_transformer(features, conv_w, conv_b, gamma, beta):
    """features: NCHW [B, C_in, H, W] (resnet output).  Returns NCHW [B, E, OH, OW]."""
    B, C, H, W = features.shape
    E, Cw, kh, kw = conv_w.shape
    assert Cw == C
    assert E % 128 == 0, "embed dim must be lane-aligned"
    OH, OW = H - kh + 1, W - kw + 1
    del conv_b  # exactly cancelled by training-mode BatchNorm (mean subtraction)

    M_rows = B * H * W
    M_valid = B * OH * OW
    max_shift = (kh - 1) * W + (kw - 1)
    # Rows the rolls may touch, rounded to a multiple of 16 (bf16 row packing).
    M_pad = ((M_rows + max_shift + 15) // 16) * 16

    # K-tile of the contraction; grid double-buffers the weight DMA.
    TK = 256 if C % 256 == 0 else C
    grid_k = C // TK

    # --- glue: NCHW -> NHWC -> [B*H*W, C], bf16, zero-padded to M_pad rows ---
    x2d = jnp.transpose(features, (0, 2, 3, 1)).reshape(M_rows, C)
    x2d = jnp.pad(x2d, ((0, M_pad - M_rows), (0, 0))).astype(jnp.bfloat16)

    # --- glue: weight [E, C, kh, kw] -> [C, kh*kw*E] (taps concatenated along N), bf16 ---
    w_all = jnp.transpose(conv_w, (1, 2, 3, 0)).reshape(C, kh * kw * E).astype(jnp.bfloat16)

    # --- validity mask, precomputed: row m = (b*H + i)*W + j is a real output corner ---
    m_ids = jnp.arange(M_pad)
    valid = (m_ids < M_rows) & ((m_ids % W) < OW) & (((m_ids // W) % H) < OH)
    mask = valid.astype(jnp.float32).reshape(M_pad, 1)

    # --- gamma / beta as a single (2, E) f32 block (one DMA) ---
    gb = jnp.stack([gamma.astype(jnp.float32), beta.astype(jnp.float32)], axis=0)

    kernel = functools.partial(
        _conv_bn_kernel, W=W, kh=kh, kw=kw, E=E, M_pad=M_pad, M_valid=M_valid)

    out_flat = pl.pallas_call(
        kernel,
        out_shape=jax.ShapeDtypeStruct((M_pad, E), jnp.float32),
        grid_spec=pltpu.PrefetchScalarGridSpec(
            num_scalar_prefetch=0,
            grid=(grid_k,),
            in_specs=[
                pl.BlockSpec((M_pad, TK), lambda k: (0, k)),            # activations
                pl.BlockSpec((TK, kh * kw * E), lambda k: (k, 0)),      # tap-concat weights
                pl.BlockSpec((M_pad, 1), lambda k: (0, 0)),             # validity mask
                pl.BlockSpec((2, E), lambda k: (0, 0)),                 # gamma/beta
            ],
            out_specs=pl.BlockSpec((M_pad, E), lambda k: (0, 0)),
            scratch_shapes=[pltpu.VMEM((M_pad, E), jnp.float32)],       # conv accumulator
        ),
        compiler_params=pltpu.CompilerParams(
            dimension_semantics=("arbitrary",),       # K is a reduction axis
            vmem_limit_bytes=32 * 1024 * 1024,        # safe on all gens (v7x: 64 MiB phys)
        ),
    )(x2d, w_all, mask, gb)

    # --- glue: drop invalid rows, [B,H,W,E] -> keep valid corners -> NCHW ---
    out = out_flat[:M_rows].reshape(B, H, W, E)[:, :OH, :OW, :]
    return jnp.transpose(out, (0, 3, 1, 2))


def _reference(features, conv_w, conv_b, gamma, beta):
    """Pure-JAX reference (Conv2d + training-mode BatchNorm2d), NCHW."""
    y = jax.lax.conv_general_dilated(
        features.astype(jnp.float32), conv_w.astype(jnp.float32),
        window_strides=(1, 1), padding="VALID",
        dimension_numbers=("NCHW", "OIHW", "NCHW"),
        precision=jax.lax.Precision.HIGHEST,
    ) + conv_b.reshape(1, -1, 1, 1)
    mean = jnp.mean(y, axis=(0, 2, 3), keepdims=True)
    var = jnp.mean((y - mean) ** 2, axis=(0, 2, 3), keepdims=True)
    return (y - mean) * jax.lax.rsqrt(var + BN_EPS) * gamma.reshape(1, -1, 1, 1) \
        + beta.reshape(1, -1, 1, 1)


if __name__ == "__main__":
    # Small deterministic shapes consistent with the module:
    # resnet18 feature map [B, 512, 7, 7], gen_embed_dim = 128.
    B, C_IN, H, W = 2, 512, 7, 7
    EMBED = 128
    KH = KW = 3

    key = jax.random.PRNGKey(0)
    k_feat, k_w, k_b = jax.random.split(key, 3)

    features = jax.random.normal(k_feat, (B, C_IN, H, W), dtype=jnp.float32)

    # PyTorch Conv2d default init: U(-1/sqrt(fan_in), 1/sqrt(fan_in))
    fan_in = C_IN * KH * KW
    bound = 1.0 / (fan_in ** 0.5)
    conv_w = jax.random.uniform(k_w, (EMBED, C_IN, KH, KW), jnp.float32, -bound, bound)
    conv_b = jax.random.uniform(k_b, (EMBED,), jnp.float32, -bound, bound)
    gamma = jnp.ones((EMBED,), jnp.float32)    # BatchNorm2d weight
    beta = jnp.zeros((EMBED,), jnp.float32)    # BatchNorm2d bias

    out = encoder_head_transformer(features, conv_w, conv_b, gamma, beta)
    out = jax.block_until_ready(out)

    ref = _reference(features, conv_w, conv_b, gamma, beta)
    assert out.shape == (B, EMBED, H - KH + 1, W - KW + 1), out.shape
    max_err = float(jnp.max(jnp.abs(out - ref)))
    assert max_err < 5e-2, f"max abs err {max_err}"

    print("KERNEL_OK")
</pallas_src>

<mosaic_0001>
module attributes {stable_mosaic.version = 11 : i64} {
  func.func @_conv_bn_kernel(%arg0: i32, %arg1: memref<128x256xbf16, #tpu.memory_space<vmem>>, %arg2: memref<256x1152xbf16, #tpu.memory_space<vmem>>, %arg3: memref<128x1xf32, #tpu.memory_space<vmem>>, %arg4: memref<2x128xf32, #tpu.memory_space<vmem>>, %arg5: memref<128x128xf32, #tpu.memory_space<vmem>>, %arg6: memref<128x128xf32, #tpu.memory_space<vmem>>) attributes {dimension_semantics = [#tpu.dimension_semantics<arbitrary>], iteration_bounds = array<i64: 2>, scalar_prefetch = 0 : i64, scratch_operands = 1 : i64, tpu.core_type = #tpu.core_type<tc>, window_params = [{transform_indices = @transform_0, window_bounds = array<i64: 128, 256>}, {transform_indices = @transform_1, window_bounds = array<i64: 256, 1152>}, {pipeline_mode = #tpu.pipeline_mode<synchronous>, transform_indices = @transform_2, window_bounds = array<i64: 128, 1>}, {pipeline_mode = #tpu.pipeline_mode<synchronous>, transform_indices = @transform_3, window_bounds = array<i64: 2, 128>}, {pipeline_mode = #tpu.pipeline_mode<synchronous>, transform_indices = @transform_4, window_bounds = array<i64: 128, 128>}]} {
    %c0_i32 = arith.constant 0 : i32
    %0 = arith.cmpi eq, %arg0, %c0_i32 : i32
    %1 = arith.extui %0 : i1 to i32
    %c0_i32_0 = arith.constant 0 : i32
    %2 = arith.cmpi ne, %1, %c0_i32_0 : i32
    scf.if %2 {
      %cst_9 = arith.constant 0.000000e+00 : f32
      %37 = vector.broadcast %cst_9 : f32 to vector<128x128xf32>
      %c0_10 = arith.constant 0 : index
      %c0_11 = arith.constant 0 : index
      %38 = vector.load %arg6[%c0_10, %c0_11] : memref<128x128xf32, #tpu.memory_space<vmem>>, vector<128x128xf32>
      tpu.vector_store %arg6[%c0_10, %c0_11], %37 {strides = array<i32>} : memref<128x128xf32, #tpu.memory_space<vmem>>, vector<128x128xf32>,
    } else {
    }
    %c0 = arith.constant 0 : index
    %c0_1 = arith.constant 0 : index
    %3 = vector.load %arg1[%c0, %c0_1] : memref<128x256xbf16, #tpu.memory_space<vmem>>, vector<128x256xbf16>
    %c0_2 = arith.constant 0 : index
    %c0_3 = arith.constant 0 : index
    %4 = vector.load %arg2[%c0_2, %c0_3] : memref<256x1152xbf16, #tpu.memory_space<vmem>>, vector<256x1152xbf16>
    %cst = arith.constant dense<0.000000e+00> : vector<128x1152xf32>
    %5 = tpu.matmul %3, %4, %cst {dimension_numbers = #tpu.dot_dimension_numbers<[1], [0], [0], [1], [0, 0, 1, 1], [], []>} : vector<128x256xbf16>, vector<256x1152xbf16>, vector<128x1152xf32> -> vector<128x1152xf32>
    %6 = vector.extract_strided_slice %5 {offsets = [0, 0], sizes = [128, 128], strides = [1, 1]} : vector<128x1152xf32> to vector<128x128xf32>
    %7 = vector.extract_strided_slice %5 {offsets = [0, 128], sizes = [128, 128], strides = [1, 1]} : vector<128x1152xf32> to vector<128x128xf32>
    %c127_i32 = arith.constant 127 : i32
    %8 = tpu.dynamic_rotate %7 by %c127_i32 dim 0 : vector<128x128xf32>, i32 -> vector<128x128xf32>
    %9 = arith.addf %6, %8 : vector<128x128xf32>
    %10 = vector.extract_strided_slice %5 {offsets = [0, 256], sizes = [128, 128], strides = [1, 1]} : vector<128x1152xf32> to vector<128x128xf32>
    %c126_i32 = arith.constant 126 : i32
    %11 = tpu.dynamic_rotate %10 by %c126_i32 dim 0 : vector<128x128xf32>, i32 -> vector<128x128xf32>
    %12 = arith.addf %9, %11 : vector<128x128xf32>
    %13 = vector.extract_strided_slice %5 {offsets = [0, 384], sizes = [128, 128], strides = [1, 1]} : vector<128x1152xf32> to vector<128x128xf32>
    %c121_i32 = arith.constant 121 : i32
    %14 = tpu.dynamic_rotate %13 by %c121_i32 dim 0 : vector<128x128xf32>, i32 -> vector<128x128xf32>
    %15 = arith.addf %12, %14 : vector<128x128xf32>
    %16 = vector.extract_strided_slice %5 {offsets = [0, 512], sizes = [128, 128], strides = [1, 1]} : vector<128x1152xf32> to vector<128x128xf32>
    %c120_i32 = arith.constant 120 : i32
    %17 = tpu.dynamic_rotate %16 by %c120_i32 dim 0 : vector<128x128xf32>, i32 -> vector<128x128xf32>
    %18 = arith.addf %15, %17 : vector<128x128xf32>
    %19 = vector.extract_strided_slice %5 {offsets = [0, 640], sizes = [128, 128], strides = [1, 1]} : vector<128x1152xf32> to vector<128x128xf32>
    %c119_i32 = arith.constant 119 : i32
    %20 = tpu.dynamic_rotate %19 by %c119_i32 dim 0 : vector<128x128xf32>, i32 -> vector<128x128xf32>
    %21 = arith.addf %18, %20 : vector<128x128xf32>
    %22 = vector.extract_strided_slice %5 {offsets = [0, 768], sizes = [128, 128], strides = [1, 1]} : vector<128x1152xf32> to vector<128x128xf32>
    %c114_i32 = arith.constant 114 : i32
    %23 = tpu.dynamic_rotate %22 by %c114_i32 dim 0 : vector<128x128xf32>, i32 -> vector<128x128xf32>
    %24 = arith.addf %21, %23 : vector<128x128xf32>
    %25 = vector.extract_strided_slice %5 {offsets = [0, 896], sizes = [128, 128], strides = [1, 1]} : vector<128x1152xf32> to vector<128x128xf32>
    %c113_i32 = arith.constant 113 : i32
    %26 = tpu.dynamic_rotate %25 by %c113_i32 dim 0 : vector<128x128xf32>, i32 -> vector<128x128xf32>
    %27 = arith.addf %24, %26 : vector<128x128xf32>
    %28 = vector.extract_strided_slice %5 {offsets = [0, 1024], sizes = [128, 128], strides = [1, 1]} : vector<128x1152xf32> to vector<128x128xf32>
    %c112_i32 = arith.constant 112 : i32
    %29 = tpu.dynamic_rotate %28 by %c112_i32 dim 0 : vector<128x128xf32>, i32 -> vector<128x128xf32>
    %30 = arith.addf %27, %29 : vector<128x128xf32>
    %c0_4 = arith.constant 0 : index
    %c0_5 = arith.constant 0 : index
    %31 = vector.load %arg6[%c0_4, %c0_5] : memref<128x128xf32, #tpu.memory_space<vmem>>, vector<128x128xf32>
    %32 = arith.addf %31, %30 : vector<128x128xf32>
    %c0_6 = arith.constant 0 : index
    %c0_7 = arith.constant 0 : index
    %33 = vector.load %arg6[%c0_6, %c0_7] : memref<128x128xf32, #tpu.memory_space<vmem>>, vector<128x128xf32>
    tpu.vector_store %arg6[%c0_6, %c0_7], %32 {strides = array<i32>} : memref<128x128xf32, #tpu.memory_space<vmem>>, vector<128x128xf32>,
    %c1_i32 = arith.constant 1 : i32
    %34 = arith.cmpi eq, %arg0, %c1_i32 : i32
    %35 = arith.extui %34 : i1 to i32
    %c0_i32_8 = arith.constant 0 : i32
    %36 = arith.cmpi ne, %35, %c0_i32_8 : i32
    scf.if %36 {
      %c0_9 = arith.constant 0 : index
      %c0_10 = arith.constant 0 : index
      %37 = vector.load %arg6[%c0_9, %c0_10] : memref<128x128xf32, #tpu.memory_space<vmem>>, vector<128x128xf32>
      %c0_11 = arith.constant 0 : index
      %c0_12 = arith.constant 0 : index
      %38 = vector.load %arg3[%c0_11, %c0_12] : memref<128x1xf32, #tpu.memory_space<vmem>>, vector<128x1xf32>
      %39 = vector.broadcast %38 : vector<128x1xf32> to vector<128x128xf32>
      %40 = arith.mulf %37, %39 : vector<128x128xf32>
      %cst_13 = arith.constant dense<0.000000e+00> : vector<128xf32>
      %41 = vector.multi_reduction <add>, %40, %cst_13 [0] : vector<128x128xf32> to vector<128xf32>
      %42 = vector.shape_cast %41 : vector<128xf32> to vector<1x128xf32>
      %43 = arith.mulf %40, %37 : vector<128x128xf32>
      %cst_14 = arith.constant dense<0.000000e+00> : vector<128xf32>
      %44 = vector.multi_reduction <add>, %43, %cst_14 [0] : vector<128x128xf32> to vector<128xf32>
      %45 = vector.shape_cast %44 : vector<128xf32> to vector<1x128xf32>
      %cst_15 = arith.constant 5.000000e+01 : f32
      %46 = vector.broadcast %cst_15 : f32 to vector<1x128xf32>
      %47 = arith.divf %42, %46 : vector<1x128xf32>
      %cst_16 = arith.constant 5.000000e+01 : f32
      %48 = vector.broadcast %cst_16 : f32 to vector<1x128xf32>
      %49 = arith.divf %45, %48 : vector<1x128xf32>
      %50 = arith.mulf %47, %47 : vector<1x128xf32>
      %51 = arith.subf %49, %50 : vector<1x128xf32>
      %cst_17 = arith.constant 9.99999974E-6 : f32
      %52 = vector.broadcast %cst_17 : f32 to vector<1x128xf32>
      %53 = arith.addf %51, %52 : vector<1x128xf32>
      %54 = math.rsqrt %53 : vector<1x128xf32>
      %c0_18 = arith.constant 0 : index
      %c0_19 = arith.constant 0 : index
      %55 = vector.load %arg4[%c0_18, %c0_19] : memref<2x128xf32, #tpu.memory_space<vmem>>, vector<1x128xf32>
      %c1 = arith.constant 1 : index
      %c0_20 = arith.constant 0 : index
      %56 = vector.load %arg4[%c1, %c0_20] : memref<2x128xf32, #tpu.memory_space<vmem>>, vector<1x128xf32>
      %57 = arith.mulf %55, %54 : vector<1x128xf32>
      %58 = arith.mulf %47, %57 : vector<1x128xf32>
      %59 = arith.subf %56, %58 : vector<1x128xf32>
      %60 = vector.broadcast %57 : vector<1x128xf32> to vector<128x128xf32>
      %61 = arith.mulf %37, %60 : vector<128x128xf32>
      %62 = vector.broadcast %59 : vector<1x128xf32> to vector<128x128xf32>
      %63 = arith.addf %61, %62 : vector<128x128xf32>
      %c0_21 = arith.constant 0 : index
      %c0_22 = arith.constant 0 : index
      %64 = vector.load %arg5[%c0_21, %c0_22] : memref<128x128xf32, #tpu.memory_space<vmem>>, vector<128x128xf32>
      tpu.vector_store %arg5[%c0_21, %c0_22], %63 {strides = array<i32>} : memref<128x128xf32, #tpu.memory_space<vmem>>, vector<128x128xf32>,
    } else {
    }
    return
  }
  func.func @transform_0(%arg0: i32) -> (i32, i32) {
    %c0_i32 = arith.constant 0 : i32
    %c0_i32_0 = arith.constant 0 : i32
    return %c0_i32, %arg0 : i32, i32
  }
  func.func @transform_1(%arg0: i32) -> (i32, i32) {
    %c0_i32 = arith.constant 0 : i32
    %c0_i32_0 = arith.constant 0 : i32
    return %arg0, %c0_i32 : i32, i32
  }
  func.func @transform_2(%arg0: i32) -> (i32, i32) {
    %c0_i32 = arith.constant 0 : i32
    %c0_i32_0 = arith.constant 0 : i32
    %c0_i32_1 = arith.constant 0 : i32
    return %c0_i32, %c0_i32_0 : i32, i32
  }
  func.func @transform_3(%arg0: i32) -> (i32, i32) {
    %c0_i32 = arith.constant 0 : i32
    %c0_i32_0 = arith.constant 0 : i32
    %c0_i32_1 = arith.constant 0 : i32
    return %c0_i32, %c0_i32_0 : i32, i32
  }
  func.func @transform_4(%arg0: i32) -> (i32, i32) {
    %c0_i32 = arith.constant 0 : i32
    %c0_i32_0 = arith.constant 0 : i32
    %c0_i32_1 = arith.constant 0 : i32
    return %c0_i32, %c0_i32_0 : i32, i32
  }
}

</mosaic_0001>

<llo_original>
// kernel: tpu_custom_call.1
$region0: #{tpu_custom_call.1}
  #allocation0 [shape = 'u32[]', space=smem, size = 0x4, offset = 0x4, fixed_abs, tag = 'smem constant byte address 0x4 - core index']
  #allocation1 [shape = 'u32[72,128]{1,0:T(1,128)}', space=vmem, size = 0x9000, scoped, tag = 'internal scratch']
  #allocation2 [shape = 'f32[128,128]{1,0:T(8,128)}', space=vmem, size = 0x10000, scoped, tag = 'scratch operand']
  %s0 = inlined_call_operand.hbm [shape: bf16[128,512], index: 0, kind: input, shape index: {}]
  %s1 = inlined_call_operand.hbm [shape: bf16[512,1152], index: 1, kind: input, shape index: {}]
  %s2 = inlined_call_operand.vmem [shape: f32[128,1], index: 2, kind: input, shape index: {}]
  %s3 = inlined_call_operand.hbm [shape: f32[2,128], index: 3, kind: input, shape index: {}]
  %s4 = inlined_call_operand.hbm [shape: f32[128,128], index: 4, kind: output, shape index: {}]
  %s5 = sld [smem:[#allocation0]]
  $region69: #{tpu_custom_call.1} parent=0
    _
  %s7 = ssub.s32 1, %s5
  %s8 = scalar_select 0, %s7, %s5
  $region1: #{tpu_custom_call.1} parent=0
    #allocation3 [shape = 'u8[131072]{0}', space=vmem, size = 0x20000, scoped, tag = 'input window, operand 0']
    #allocation4 [shape = 's32[2]{0}', space=sflag, size = 0x8, scoped, tag = 'scoped memory for tpu_custom_call.1']
    #allocation5 [shape = 's32[2]{0}', space=sflag, size = 0x8, scoped, tag = 'scoped memory for tpu_custom_call.1']
    #allocation6 [shape = 'u8[1179648]{0}', space=vmem, size = 0x120000, scoped, tag = 'input window, operand 1']
    #allocation7 [shape = 's32[2]{0}', space=sflag, size = 0x8, scoped, tag = 'scoped memory for tpu_custom_call.1']
    #allocation8 [shape = 'u8[1024]{0}', space=vmem, size = 0x400, scoped, tag = 'input window, operand 3, single buffered']
    #allocation9 [shape = 'u8[65536]{0}', space=vmem, size = 0x10000, scoped, tag = 'output window, operand 0, single buffered']
    %9 = vsyncpa [#allocation4], 0
    %s10 = scalar_lea.sflag [#allocation4], 1
    %11 = vsyncpa %s10, 0
    %12 = vsyncpa [#allocation7], 0
    %s13 = scalar_lea.sflag [#allocation7], 1
    %14 = vsyncpa %s13, 0
    %15 = vsyncpa [#allocation5], 0
    loop: start=0, step=1, limit=4
    $region2: #{tpu_custom_call.1} parent=1 // loop_pre_header
      _
    $region3: #{tpu_custom_call.1} parent=1 // loop_header
      %s17 = sphi 0, %s21
      %p18 = scmp.ge.s32.totalorder %s17, 4
      %s27 = sphi 0, %s29
      %s30 = sphi 0, %s27
      %s31 = sphi 0, %s30
      %s47 = sphi 0, %s31
      %s53 = sphi 0, %s55
      %s56 = sphi 0, %s53
      %s57 = sphi 0, %s56
      %s73 = sphi 0, %s57
      %s77 = sphi 0, %s77
      %s79 = sphi 0, %s77
      %s80 = sphi 0, %s79
      %s94 = sphi 0, %s80
      %s98 = sphi 0, %s98
      %s100 = sphi 0, %s98
      %s101 = sphi 0, %s100
      %s115 = sphi 0, %s101
      %s119 = sphi 0, %s119
      %s121 = sphi 0, %s119
      %s122 = sphi 0, %s121
      %s136 = sphi 0, %s122
    $region4: #{tpu_custom_call.1} parent=1 // loop_header_branch
      %20 = sbr.rel (%p18) target = $region8
    $region5: #{tpu_custom_call.1} parent=1 // loop_body
      %s22 = ssub.s32 %s17, 1
      %s23 = ssub.s32 %s17, 2
      %s24 = sadd.s32 %s17, 1
      %s25 = ssub.s32 %s17, %s24
      %p26 = scmp.eq.s32.totalorder %s25, 0
      %s28 = sadd.s32 %s27, 1
      %s29 = scalar_select %p26, %s27, %s28
      %p32 = pneg %p26
      %p33 = scmp.eq.s32.totalorder %s17, 1
      %p34 = por %p32, %p33
      %p35 = scmp.ne.s32.totalorder %s27, %s30
      %p36 = scmp.eq.s32.totalorder %s17, 0
      %p37 = por %p35, %p36
      %p38 = scmp.ne.s32.totalorder %s27, %s30
      %p39 = scmp.eq.s32.totalorder %s22, 1
      %p40 = por %p38, %p39
      %p41 = scmp.ne.s32.totalorder %s30, %s31
      %p42 = scmp.eq.s32.totalorder %s22, 0
      %p43 = por %p41, %p42
      %p44 = scmp.ne.s32.totalorder %s30, %s31
      %p45 = scmp.eq.s32.totalorder %s23, 1
      %p46 = por %p44, %p45
      %p48 = scmp.ne.s32.totalorder %s31, %s47
      %p49 = scmp.eq.s32.totalorder %s23, 0
      %p50 = por %p48, %p49
      %s51 = ssub.s32 %s17, %s24
      %p52 = scmp.eq.s32.totalorder %s51, 0
      %s54 = sadd.s32 %s53, 1
      %s55 = scalar_select %p52, %s53, %s54
      %p58 = pneg %p52
      %p59 = scmp.eq.s32.totalorder %s17, 1
      %p60 = por %p58, %p59
      %p61 = scmp.ne.s32.totalorder %s53, %s56
      %p62 = scmp.eq.s32.totalorder %s17, 0
      %p63 = por %p61, %p62
      %p64 = scmp.ne.s32.totalorder %s53, %s56
      %p65 = scmp.eq.s32.totalorder %s22, 1
      %p66 = por %p64, %p65
      %p67 = scmp.ne.s32.totalorder %s56, %s57
      %p68 = scmp.eq.s32.totalorder %s22, 0
      %p69 = por %p67, %p68
      %p70 = scmp.ne.s32.totalorder %s56, %s57
      %p71 = scmp.eq.s32.totalorder %s23, 1
      %p72 = por %p70, %p71
      %p74 = scmp.ne.s32.totalorder %s57, %s73
      %p75 = scmp.eq.s32.totalorder %s23, 0
      %p76 = por %p74, %p75
      %s78 = sadd.s32 %s77, 1
      %p81 = scmp.eq.s32.totalorder %s17, 1
      %p82 = scmp.ne.s32.totalorder %s77, %s79
      %p83 = scmp.eq.s32.totalorder %s17, 0
      %p84 = por %p82, %p83
      %p85 = scmp.ne.s32.totalorder %s77, %s79
      %p86 = scmp.eq.s32.totalorder %s22, 1
      %p87 = por %p85, %p86
      %p88 = scmp.ne.s32.totalorder %s79, %s80
      %p89 = scmp.eq.s32.totalorder %s22, 0
      %p90 = por %p88, %p89
      %p91 = scmp.ne.s32.totalorder %s79, %s80
      %p92 = scmp.eq.s32.totalorder %s23, 1
      %p93 = por %p91, %p92
      %p95 = scmp.ne.s32.totalorder %s80, %s94
      %p96 = scmp.eq.s32.totalorder %s23, 0
      %p97 = por %p95, %p96
      %s99 = sadd.s32 %s98, 1
      %p102 = scmp.eq.s32.totalorder %s17, 1
      %p103 = scmp.ne.s32.totalorder %s98, %s100
      %p104 = scmp.eq.s32.totalorder %s17, 0
      %p105 = por %p103, %p104
      %p106 = scmp.ne.s32.totalorder %s98, %s100
      %p107 = scmp.eq.s32.totalorder %s22, 1
      %p108 = por %p106, %p107
      %p109 = scmp.ne.s32.totalorder %s100, %s101
      %p110 = scmp.eq.s32.totalorder %s22, 0
      %p111 = por %p109, %p110
      %p112 = scmp.ne.s32.totalorder %s100, %s101
      %p113 = scmp.eq.s32.totalorder %s23, 1
      %p114 = por %p112, %p113
      %p116 = scmp.ne.s32.totalorder %s101, %s115
      %p117 = scmp.eq.s32.totalorder %s23, 0
      %p118 = por %p116, %p117
      %s120 = sadd.s32 %s119, 1
      %p123 = scmp.eq.s32.totalorder %s17, 1
      %p124 = scmp.ne.s32.totalorder %s119, %s121
      %p125 = scmp.eq.s32.totalorder %s17, 0
      %p126 = por %p124, %p125
      %p127 = scmp.ne.s32.totalorder %s119, %s121
      %p128 = scmp.eq.s32.totalorder %s22, 1
      %p129 = por %p127, %p128
      %p130 = scmp.ne.s32.totalorder %s121, %s122
      %p131 = scmp.eq.s32.totalorder %s22, 0
      %p132 = por %p130, %p131
      %p133 = scmp.ne.s32.totalorder %s121, %s122
      %p134 = scmp.eq.s32.totalorder %s23, 1
      %p135 = por %p133, %p134
      %p137 = scmp.ne.s32.totalorder %s122, %s136
      %p138 = scmp.eq.s32.totalorder %s23, 0
      %p139 = por %p137, %p138
      %p140 = scmp.le.s32.totalorder 1, %s17
      %p141 = scmp.lt.s32.totalorder %s17, 3
      %p142 = pnand %p140, %p141
      %p143 = pneg %p142
      // Predicated region
      $region9: #{tpu_custom_call.1} parent=5 // pred_check
        _
      $region10: #{tpu_custom_call.1} parent=5 // pred_check_branch
        %145 = sbr.rel (%p142) target = $region12
      $region11: #{tpu_custom_call.1} parent=5 // pred_region
        %s146 = ssub.s32 %s17, 1
        // Predicated region
        $region13: #{tpu_custom_call.1} parent=11 // pred_check
          %p147 = pneg %p90
        $region14: #{tpu_custom_call.1} parent=11 // pred_check_branch
          %149 = sbr.rel (%p147) target = $region16
        $region15: #{tpu_custom_call.1} parent=11 // pred_region
          _
        $region16: #{tpu_custom_call.1} parent=11 // pred_fallthru
          _
        // Predicated region
        $region17: #{tpu_custom_call.1} parent=11 // pred_check
          %p150 = pneg %p111
        $region18: #{tpu_custom_call.1} parent=11 // pred_check_branch
          %152 = sbr.rel (%p150) target = $region20
        $region19: #{tpu_custom_call.1} parent=11 // pred_region
          %154 = vsyncadd [#allocation7], 0
          %s156 = sshll.u32 %s3, 4
          %s157 = int_to_ptr.hbm [resolvable:$true] %s156
          %s158 = sshll.u32 [#allocation8], 4
          %s159 = int_to_ptr.vmem [resolvable:$true] %s158
          %161 = dma.hbm_to_vmem [thread:$0]  %s157, 32, %s159, [#allocation7]
        $region20: #{tpu_custom_call.1} parent=11 // pred_fallthru
          _
      $region12: #{tpu_custom_call.1} parent=5 // pred_fallthru
        _
      %p162 = scmp.lt.s32.totalorder %s17, 2
      // Predicated region
      $region21: #{tpu_custom_call.1} parent=5 // pred_check
        %p163 = pneg %p162
      $region22: #{tpu_custom_call.1} parent=5 // pred_check_branch
        %165 = sbr.rel (%p163) target = $region24
      $region23: #{tpu_custom_call.1} parent=5 // pred_region
        // Predicated region
        $region25: #{tpu_custom_call.1} parent=23 // pred_check
          %p166 = pneg %p37
        $region26: #{tpu_custom_call.1} parent=23 // pred_check_branch
          %168 = sbr.rel (%p166) target = $region28
        $region27: #{tpu_custom_call.1} parent=23 // pred_region
          %s169 = sand.u32 %s27, 1
          %s170 = scalar_lea.sflag [#allocation4], %s169
          %s171 = sand.u32 %s27, 1
          %s172 = smul.addr %s171, 128
          %s173 = scalar_lea.vmem [#allocation3], %s172
          %s174 = smul.u32 2, %s17
          %176 = vsyncadd %s170, 0
          %s177 = smul.addr %s174, 4
          %s178 = scalar_lea.hbm %s0, %s177
          %s179 = sshll.u32 %s178, 4
          %s180 = int_to_ptr.hbm [resolvable:$true] %s179
          %s181 = sshll.u32 %s173, 4
          %s182 = int_to_ptr.vmem [resolvable:$true] %s181
          %187 = dma.hbm_to_vmem [thread:$0]  %s180, 2048, %s182, %s170, 256, 128, 8
        $region28: #{tpu_custom_call.1} parent=23 // pred_fallthru
          _
        // Predicated region
        $region29: #{tpu_custom_call.1} parent=23 // pred_check
          %p188 = pneg %p63
        $region30: #{tpu_custom_call.1} parent=23 // pred_check_branch
          %190 = sbr.rel (%p188) target = $region32
        $region31: #{tpu_custom_call.1} parent=23 // pred_region
          %s191 = sand.u32 %s17, 1
          %s192 = scalar_lea.sflag [#allocation7], %s191
          %s193 = sand.u32 %s53, 1
          %s194 = smul.addr %s193, 1152
          %s195 = scalar_lea.vmem [#allocation6], %s194
          %s196 = smul.u32 32, %s17
          %198 = vsyncadd %s192, 0
          %s199 = smul.addr %s196, 9
          %s200 = smul.addr %s199, 4
          %s201 = scalar_lea.hbm %s1, %s200
          %s202 = sshll.u32 %s201, 4
          %s203 = int_to_ptr.hbm [resolvable:$true] %s202
          %s204 = sshll.u32 %s195, 4
          %s205 = int_to_ptr.vmem [resolvable:$true] %s204
          %210 = dma.hbm_to_vmem [thread:$0]  %s203, 18432, %s205, %s192, 576, 576, 36
        $region32: #{tpu_custom_call.1} parent=23 // pred_fallthru
          _
      $region24: #{tpu_custom_call.1} parent=5 // pred_fallthru
        _
      %p211 = scmp.le.s32.totalorder 1, %s17
      %p212 = scmp.lt.s32.totalorder %s17, 3
      %p213 = pnand %p211, %p212
      %p214 = pneg %p213
      // Predicated region
      $region33: #{tpu_custom_call.1} parent=5 // pred_check
        _
      $region34: #{tpu_custom_call.1} parent=5 // pred_check_branch
        %216 = sbr.rel (%p213) target = $region36
      $region35: #{tpu_custom_call.1} parent=5 // pred_region
        %s217 = ssub.s32 %s17, 1
        %s218 = sand.u32 %s30, 1
        %s219 = scalar_lea.sflag [#allocation4], %s218
        %s220 = sand.u32 %s30, 1
        %s221 = smul.addr %s220, 128
        %s222 = scalar_lea.vmem [#allocation3], %s221
        // Predicated region
        $region37: #{tpu_custom_call.1} parent=35 // pred_check
          %p223 = pneg %p43
        $region38: #{tpu_custom_call.1} parent=35 // pred_check_branch
          %225 = sbr.rel (%p223) target = $region40
        $region39: #{tpu_custom_call.1} parent=35 // pred_region
          %227 = dma.done %s219, 2048
        $region40: #{tpu_custom_call.1} parent=35 // pred_fallthru
          _
        %s228 = sand.u32 %s22, 1
        %s229 = scalar_lea.sflag [#allocation7], %s228
        %s230 = sand.u32 %s56, 1
        %s231 = smul.addr %s230, 1152
        %s232 = scalar_lea.vmem [#allocation6], %s231
        // Predicated region
        $region41: #{tpu_custom_call.1} parent=35 // pred_check
          %p233 = pneg %p69
        $region42: #{tpu_custom_call.1} parent=35 // pred_check_branch
          %235 = sbr.rel (%p233) target = $region44
        $region43: #{tpu_custom_call.1} parent=35 // pred_region
          %237 = dma.done %s229, 18432
        $region44: #{tpu_custom_call.1} parent=35 // pred_fallthru
          _
        // Predicated region
        $region45: #{tpu_custom_call.1} parent=35 // pred_check
          %p238 = pneg %p111
        $region46: #{tpu_custom_call.1} parent=35 // pred_check_branch
          %240 = sbr.rel (%p238) target = $region48
        $region47: #{tpu_custom_call.1} parent=35 // pred_region
          %242 = dma.done [#allocation7], 32
        $region48: #{tpu_custom_call.1} parent=35 // pred_fallthru
          _
        %s243 = sand.u32 %s30, 1
        %s244 = scalar_lea.sflag [#allocation4], %s243
        %s245 = sand.u32 %s30, 1
        %s246 = smul.addr %s245, 128
        %s247 = scalar_lea.vmem [#allocation3], %s246
        %p248 = pneg %p43
        %p249 = pneg %p40
        %s250 = sand.u32 %s22, 1
        %s251 = scalar_lea.sflag [#allocation7], %s250
        %s252 = sand.u32 %s56, 1
        %s253 = smul.addr %s252, 1152
        %s254 = scalar_lea.vmem [#allocation6], %s253
        %p255 = pneg %p69
        %p256 = pneg %p66
        %p257 = pneg %p90
        %p258 = pneg %p87
        %p259 = pneg %p111
        %p260 = pneg %p108
        %p261 = pneg %p132
        %p262 = pneg %p129
        %s263 = smul.u32 2, %s22
        %s264 = smul.u32 32, %s22
        %p265 = scmp.eq.s32.totalorder %s22, 0
        // Predicated region
        $region49: #{tpu_custom_call.1} parent=35 // pred_check
          %p266 = pneg %p265
        $region50: #{tpu_custom_call.1} parent=35 // pred_check_branch
          %268 = sbr.rel (%p266) target = $region52
        $region51: #{tpu_custom_call.1} parent=35 // pred_region
          %269 = vst [vmem:[#allocation2] sm:$0xff] 0.0
          %270 = vst [vmem:[#allocation2 + $0x8] sm:$0xff] 0.0
          %271 = vst [vmem:[#allocation2 + $0x10] sm:$0xff] 0.0
          %272 = vst [vmem:[#allocation2 + $0x18] sm:$0xff] 0.0
          %273 = vst [vmem:[#allocation2 + $0x20] sm:$0xff] 0.0
          %274 = vst [vmem:[#allocation2 + $0x28] sm:$0xff] 0.0
          %275 = vst [vmem:[#allocation2 + $0x30] sm:$0xff] 0.0
          %276 = vst [vmem:[#allocation2 + $0x38] sm:$0xff] 0.0
          %277 = vst [vmem:[#allocation2 + $0x40] sm:$0xff] 0.0
          %278 = vst [vmem:[#allocation2 + $0x48] sm:$0xff] 0.0
          %279 = vst [vmem:[#allocation2 + $0x50] sm:$0xff] 0.0
          %280 = vst [vmem:[#allocation2 + $0x58] sm:$0xff] 0.0
          %281 = vst [vmem:[#allocation2 + $0x60] sm:$0xff] 0.0
          %282 = vst [vmem:[#allocation2 + $0x68] sm:$0xff] 0.0
          %283 = vst [vmem:[#allocation2 + $0x70] sm:$0xff] 0.0
          %284 = vst [vmem:[#allocation2 + $0x78] sm:$0xff] 0.0
        $region52: #{tpu_custom_call.1} parent=35 // pred_fallthru
          _
        %v285 = vld [vmem:[%s222] sm:$0xff]
        %v286 = vld [vmem:[%s222 + $0x8] sm:$0xff]
        %v287 = vld [vmem:[%s222 + $0x10] sm:$0xff]
        %v288 = vld [vmem:[%s222 + $0x18] sm:$0xff]
        %v289 = vld [vmem:[%s222 + $0x20] sm:$0xff]
        %v290 = vld [vmem:[%s222 + $0x28] sm:$0xff]
        %v291 = vld [vmem:[%s222 + $0x30] sm:$0xff]
        %v292 = vld [vmem:[%s222 + $0x38] sm:$0xff]
        %v293 = vld [vmem:[%s222 + $0x40] sm:$0xff]
        %v294 = vld [vmem:[%s222 + $0x48] sm:$0xff]
        %v295 = vld [vmem:[%s222 + $0x50] sm:$0xff]
        %v296 = vld [vmem:[%s222 + $0x58] sm:$0xff]
        %v297 = vld [vmem:[%s222 + $0x60] sm:$0xff]
        %v298 = vld [vmem:[%s222 + $0x68] sm:$0xff]
        %v299 = vld [vmem:[%s222 + $0x70] sm:$0xff]
        %v300 = vld [vmem:[%s222 + $0x78] sm:$0xff]
        %v301 = vld [vmem:[%s232] sm:$0xff]
        %v302 = vld [vmem:[%s232 + $0x8] sm:$0xff]
        %v303 = vld [vmem:[%s232 + $0x10] sm:$0xff]
        %v304 = vld [vmem:[%s232 + $0x18] sm:$0xff]
        %v305 = vld [vmem:[%s232 + $0x20] sm:$0xf]
        %v306 = vld [vmem:[%s232 + $0x24] sm:$0xff]
        %v307 = vld [vmem:[%s232 + $0x2c] sm:$0xff]
        %v308 = vld [vmem:[%s232 + $0x34] sm:$0xff]
        %v309 = vld [vmem:[%s232 + $0x3c] sm:$0xff]
        %v310 = vld [vmem:[%s232 + $0x44] sm:$0xf]
        %v311 = vld [vmem:[%s232 + $0x48] sm:$0xff]
        %v312 = vld [vmem:[%s232 + $0x50] sm:$0xff]
        %v313 = vld [vmem:[%s232 + $0x58] sm:$0xff]
        %v314 = vld [vmem:[%s232 + $0x60] sm:$0xff]
        %v315 = vld [vmem:[%s232 + $0x68] sm:$0xf]
        %v316 = vld [vmem:[%s232 + $0x6c] sm:$0xff]
        %v317 = vld [vmem:[%s232 + $0x74] sm:$0xff]
        %v318 = vld [vmem:[%s232 + $0x7c] sm:$0xff]
        %v319 = vld [vmem:[%s232 + $0x84] sm:$0xff]
        %v320 = vld [vmem:[%s232 + $0x8c] sm:$0xf]
        %v321 = vld [vmem:[%s232 + $0x90] sm:$0xff]
        %v322 = vld [vmem:[%s232 + $0x98] sm:$0xff]
        %v323 = vld [vmem:[%s232 + $0xa0] sm:$0xff]
        %v324 = vld [vmem:[%s232 + $0xa8] sm:$0xff]
        %v325 = vld [vmem:[%s232 + $0xb0] sm:$0xf]
        %v326 = vld [vmem:[%s232 + $0xb4] sm:$0xff]
        %v327 = vld [vmem:[%s232 + $0xbc] sm:$0xff]
        %v328 = vld [vmem:[%s232 + $0xc4] sm:$0xff]
        %v329 = vld [vmem:[%s232 + $0xcc] sm:$0xff]
        %v330 = vld [vmem:[%s232 + $0xd4] sm:$0xf]
        %v331 = vld [vmem:[%s232 + $0xd8] sm:$0xff]
        %v332 = vld [vmem:[%s232 + $0xe0] sm:$0xff]
        %v333 = vld [vmem:[%s232 + $0xe8] sm:$0xff]
        %v334 = vld [vmem:[%s232 + $0xf0] sm:$0xff]
        %v335 = vld [vmem:[%s232 + $0xf8] sm:$0xf]
        %v336 = vld [vmem:[%s232 + $0xfc] sm:$0xff]
        %v337 = vld [vmem:[%s232 + $0x104] sm:$0xff]
        %v338 = vld [vmem:[%s232 + $0x10c] sm:$0xff]
        %v339 = vld [vmem:[%s232 + $0x114] sm:$0xff]
        %v340 = vld [vmem:[%s232 + $0x11c] sm:$0xf]
        %v341 = vld [vmem:[%s232 + $0x120] sm:$0xff]
        %v342 = vld [vmem:[%s232 + $0x128] sm:$0xff]
        %v343 = vld [vmem:[%s232 + $0x130] sm:$0xff]
        %v344 = vld [vmem:[%s232 + $0x138] sm:$0xff]
        %v345 = vld [vmem:[%s232 + $0x140] sm:$0xf]
        %v346 = vld [vmem:[%s232 + $0x144] sm:$0xff]
        %v347 = vld [vmem:[%s232 + $0x14c] sm:$0xff]
        %v348 = vld [vmem:[%s232 + $0x154] sm:$0xff]
        %v349 = vld [vmem:[%s232 + $0x15c] sm:$0xff]
        %v350 = vld [vmem:[%s232 + $0x164] sm:$0xf]
        %v351 = vld [vmem:[%s232 + $0x168] sm:$0xff]
        %v352 = vld [vmem:[%s232 + $0x170] sm:$0xff]
        %v353 = vld [vmem:[%s232 + $0x178] sm:$0xff]
        %v354 = vld [vmem:[%s232 + $0x180] sm:$0xff]
        %v355 = vld [vmem:[%s232 + $0x188] sm:$0xf]
        %v356 = vld [vmem:[%s232 + $0x18c] sm:$0xff]
        %v357 = vld [vmem:[%s232 + $0x194] sm:$0xff]
        %v358 = vld [vmem:[%s232 + $0x19c] sm:$0xff]
        %v359 = vld [vmem:[%s232 + $0x1a4] sm:$0xff]
        %v360 = vld [vmem:[%s232 + $0x1ac] sm:$0xf]
        %v361 = vld [vmem:[%s232 + $0x1b0] sm:$0xff]
        %v362 = vld [vmem:[%s232 + $0x1b8] sm:$0xff]
        %v363 = vld [vmem:[%s232 + $0x1c0] sm:$0xff]
        %v364 = vld [vmem:[%s232 + $0x1c8] sm:$0xff]
        %v365 = vld [vmem:[%s232 + $0x1d0] sm:$0xf]
        %v366 = vld [vmem:[%s232 + $0x1d4] sm:$0xff]
        %v367 = vld [vmem:[%s232 + $0x1dc] sm:$0xff]
        %v368 = vld [vmem:[%s232 + $0x1e4] sm:$0xff]
        %v369 = vld [vmem:[%s232 + $0x1ec] sm:$0xff]
        %v370 = vld [vmem:[%s232 + $0x1f4] sm:$0xf]
        %v371 = vld [vmem:[%s232 + $0x1f8] sm:$0xff]
        %v372 = vld [vmem:[%s232 + $0x200] sm:$0xff]
        %v373 = vld [vmem:[%s232 + $0x208] sm:$0xff]
        %v374 = vld [vmem:[%s232 + $0x210] sm:$0xff]
        %v375 = vld [vmem:[%s232 + $0x218] sm:$0xf]
        %v376 = vld [vmem:[%s232 + $0x21c] sm:$0xff]
        %v377 = vld [vmem:[%s232 + $0x224] sm:$0xff]
        %v378 = vld [vmem:[%s232 + $0x22c] sm:$0xff]
        %v379 = vld [vmem:[%s232 + $0x234] sm:$0xff]
        %v380 = vld [vmem:[%s232 + $0x23c] sm:$0xf]
        %v381 = vld [vmem:[%s232 + $0x240] sm:$0xff]
        %v382 = vld [vmem:[%s232 + $0x248] sm:$0xff]
        %v383 = vld [vmem:[%s232 + $0x250] sm:$0xff]
        %v384 = vld [vmem:[%s232 + $0x258] sm:$0xff]
        %v385 = vld [vmem:[%s232 + $0x260] sm:$0xf]
        %v386 = vld [vmem:[%s232 + $0x264] sm:$0xff]
        %v387 = vld [vmem:[%s232 + $0x26c] sm:$0xff]
        %v388 = vld [vmem:[%s232 + $0x274] sm:$0xff]
        %v389 = vld [vmem:[%s232 + $0x27c] sm:$0xff]
        %v390 = vld [vmem:[%s232 + $0x284] sm:$0xf]
        %v391 = vld [vmem:[%s232 + $0x288] sm:$0xff]
        %v392 = vld [vmem:[%s232 + $0x290] sm:$0xff]
        %v393 = vld [vmem:[%s232 + $0x298] sm:$0xff]
        %v394 = vld [vmem:[%s232 + $0x2a0] sm:$0xff]
        %v395 = vld [vmem:[%s232 + $0x2a8] sm:$0xf]
        %v396 = vld [vmem:[%s232 + $0x2ac] sm:$0xff]
        %v397 = vld [vmem:[%s232 + $0x2b4] sm:$0xff]
        %v398 = vld [vmem:[%s232 + $0x2bc] sm:$0xff]
        %v399 = vld [vmem:[%s232 + $0x2c4] sm:$0xff]
        %v400 = vld [vmem:[%s232 + $0x2cc] sm:$0xf]
        %v401 = vld [vmem:[%s232 + $0x2d0] sm:$0xff]
        %v402 = vld [vmem:[%s232 + $0x2d8] sm:$0xff]
        %v403 = vld [vmem:[%s232 + $0x2e0] sm:$0xff]
        %v404 = vld [vmem:[%s232 + $0x2e8] sm:$0xff]
        %v405 = vld [vmem:[%s232 + $0x2f0] sm:$0xf]
        %v406 = vld [vmem:[%s232 + $0x2f4] sm:$0xff]
        %v407 = vld [vmem:[%s232 + $0x2fc] sm:$0xff]
        %v408 = vld [vmem:[%s232 + $0x304] sm:$0xff]
        %v409 = vld [vmem:[%s232 + $0x30c] sm:$0xff]
        %v410 = vld [vmem:[%s232 + $0x314] sm:$0xf]
        %v411 = vld [vmem:[%s232 + $0x318] sm:$0xff]
        %v412 = vld [vmem:[%s232 + $0x320] sm:$0xff]
        %v413 = vld [vmem:[%s232 + $0x328] sm:$0xff]
        %v414 = vld [vmem:[%s232 + $0x330] sm:$0xff]
        %v415 = vld [vmem:[%s232 + $0x338] sm:$0xf]
        %v416 = vld [vmem:[%s232 + $0x33c] sm:$0xff]
        %v417 = vld [vmem:[%s232 + $0x344] sm:$0xff]
        %v418 = vld [vmem:[%s232 + $0x34c] sm:$0xff]
        %v419 = vld [vmem:[%s232 + $0x354] sm:$0xff]
        %v420 = vld [vmem:[%s232 + $0x35c] sm:$0xf]
        %v421 = vld [vmem:[%s232 + $0x360] sm:$0xff]
        %v422 = vld [vmem:[%s232 + $0x368] sm:$0xff]
        %v423 = vld [vmem:[%s232 + $0x370] sm:$0xff]
        %v424 = vld [vmem:[%s232 + $0x378] sm:$0xff]
        %v425 = vld [vmem:[%s232 + $0x380] sm:$0xf]
        %v426 = vld [vmem:[%s232 + $0x384] sm:$0xff]
        %v427 = vld [vmem:[%s232 + $0x38c] sm:$0xff]
        %v428 = vld [vmem:[%s232 + $0x394] sm:$0xff]
        %v429 = vld [vmem:[%s232 + $0x39c] sm:$0xff]
        %v430 = vld [vmem:[%s232 + $0x3a4] sm:$0xf]
        %v431 = vld [vmem:[%s232 + $0x3a8] sm:$0xff]
        %v432 = vld [vmem:[%s232 + $0x3b0] sm:$0xff]
        %v433 = vld [vmem:[%s232 + $0x3b8] sm:$0xff]
        %v434 = vld [vmem:[%s232 + $0x3c0] sm:$0xff]
        %v435 = vld [vmem:[%s232 + $0x3c8] sm:$0xf]
        %v436 = vld [vmem:[%s232 + $0x3cc] sm:$0xff]
        %v437 = vld [vmem:[%s232 + $0x3d4] sm:$0xff]
        %v438 = vld [vmem:[%s232 + $0x3dc] sm:$0xff]
        %v439 = vld [vmem:[%s232 + $0x3e4] sm:$0xff]
        %v440 = vld [vmem:[%s232 + $0x3ec] sm:$0xf]
        %v441 = vld [vmem:[%s232 + $0x3f0] sm:$0xff]
        %v442 = vld [vmem:[%s232 + $0x3f8] sm:$0xff]
        %v443 = vld [vmem:[%s232 + $0x400] sm:$0xff]
        %v444 = vld [vmem:[%s232 + $0x408] sm:$0xff]
        %v445 = vld [vmem:[%s232 + $0x410] sm:$0xf]
        %v446 = vld [vmem:[%s232 + $0x414] sm:$0xff]
        %v447 = vld [vmem:[%s232 + $0x41c] sm:$0xff]
        %v448 = vld [vmem:[%s232 + $0x424] sm:$0xff]
        %v449 = vld [vmem:[%s232 + $0x42c] sm:$0xff]
        %v450 = vld [vmem:[%s232 + $0x434] sm:$0xf]
        %v451 = vld [vmem:[%s232 + $0x438] sm:$0xff]
        %v452 = vld [vmem:[%s232 + $0x440] sm:$0xff]
        %v453 = vld [vmem:[%s232 + $0x448] sm:$0xff]
        %v454 = vld [vmem:[%s232 + $0x450] sm:$0xff]
        %v455 = vld [vmem:[%s232 + $0x458] sm:$0xf]
        %v456 = vld [vmem:[%s232 + $0x45c] sm:$0xff]
        %v457 = vld [vmem:[%s232 + $0x464] sm:$0xff]
        %v458 = vld [vmem:[%s232 + $0x46c] sm:$0xff]
        %v459 = vld [vmem:[%s232 + $0x474] sm:$0xff]
        %v460 = vld [vmem:[%s232 + $0x47c] sm:$0xf]
        %v477 = vunpack.c.l.b16 %v285
        %v478 = vunpack.c.h.b16 %v285
        %v479 = vunpack.c.l.b16 %v286
        %v480 = vunpack.c.h.b16 %v286
        %v481 = vunpack.c.l.b16 %v287
        %v482 = vunpack.c.h.b16 %v287
        %v483 = vunpack.c.l.b16 %v288
        %v484 = vunpack.c.h.b16 %v288
        %v485 = vunpack.c.l.b16 %v289
        %v486 = vunpack.c.h.b16 %v289
        %v487 = vunpack.c.l.b16 %v290
        %v488 = vunpack.c.h.b16 %v290
        %v489 = vunpack.c.l.b16 %v291
        %v490 = vunpack.c.h.b16 %v291
        %v491 = vunpack.c.l.b16 %v292
        %v492 = vunpack.c.h.b16 %v292
        %v493 = vunpack.c.l.b16 %v293
        %v494 = vunpack.c.h.b16 %v293
        %v495 = vunpack.c.l.b16 %v294
        %v496 = vunpack.c.h.b16 %v294
        %v497 = vunpack.c.l.b16 %v295
        %v498 = vunpack.c.h.b16 %v295
        %v499 = vunpack.c.l.b16 %v296
        %v500 = vunpack.c.h.b16 %v296
        %v501 = vunpack.c.l.b16 %v297
        %v502 = vunpack.c.h.b16 %v297
        %v503 = vunpack.c.l.b16 %v298
        %v504 = vunpack.c.h.b16 %v298
        %v505 = vunpack.c.l.b16 %v299
        %v506 = vunpack.c.h.b16 %v299
        %v507 = vunpack.c.l.b16 %v300
        %v508 = vunpack.c.h.b16 %v300
        %v509 = vpack.c.b16 %v479, %v477
        %v510 = vpack.c.b16 %v480, %v478
        %v511 = vpack.c.b16 %v483, %v481
        %v512 = vpack.c.b16 %v484, %v482
        %v513 = vpack.c.b16 %v487, %v485
        %v514 = vpack.c.b16 %v488, %v486
        %v515 = vpack.c.b16 %v491, %v489
        %v516 = vpack.c.b16 %v492, %v490
        %v517 = vpack.c.b16 %v495, %v493
        %v518 = vpack.c.b16 %v496, %v494
        %v519 = vpack.c.b16 %v499, %v497
        %v520 = vpack.c.b16 %v500, %v498
        %v521 = vpack.c.b16 %v503, %v501
        %v522 = vpack.c.b16 %v504, %v502
        %v523 = vpack.c.b16 %v507, %v505
        %v524 = vpack.c.b16 %v508, %v506
        %v701 = vunpack.c.l.b16 %v301
        %v702 = vunpack.c.h.b16 %v301
        %v703 = vunpack.c.l.b16 %v302
        %v704 = vunpack.c.h.b16 %v302
        %v705 = vunpack.c.l.b16 %v303
        %v706 = vunpack.c.h.b16 %v303
        %v707 = vunpack.c.l.b16 %v304
        %v708 = vunpack.c.h.b16 %v304
        %v709 = vunpack.c.l.b16 %v305
        %v710 = vunpack.c.l.b16 %v306
        %v711 = vunpack.c.h.b16 %v306
        %v712 = vunpack.c.l.b16 %v307
        %v713 = vunpack.c.h.b16 %v307
        %v714 = vunpack.c.l.b16 %v308
        %v715 = vunpack.c.h.b16 %v308
        %v716 = vunpack.c.l.b16 %v309
        %v717 = vunpack.c.h.b16 %v309
        %v718 = vunpack.c.l.b16 %v310
        %v719 = vunpack.c.l.b16 %v311
        %v720 = vunpack.c.h.b16 %v311
        %v721 = vunpack.c.l.b16 %v312
        %v722 = vunpack.c.h.b16 %v312
        %v723 = vunpack.c.l.b16 %v313
        %v724 = vunpack.c.h.b16 %v313
        %v725 = vunpack.c.l.b16 %v314
        %v726 = vunpack.c.h.b16 %v314
        %v727 = vunpack.c.l.b16 %v315
        %v728 = vunpack.c.l.b16 %v316
        %v729 = vunpack.c.h.b16 %v316
        %v730 = vunpack.c.l.b16 %v317
        %v731 = vunpack.c.h.b16 %v317
        %v732 = vunpack.c.l.b16 %v318
        %v733 = vunpack.c.h.b16 %v318
        %v734 = vunpack.c.l.b16 %v319
        %v735 = vunpack.c.h.b16 %v319
        %v736 = vunpack.c.l.b16 %v320
        %v737 = vunpack.c.l.b16 %v321
        %v738 = vunpack.c.h.b16 %v321
        %v739 = vunpack.c.l.b16 %v322
        %v740 = vunpack.c.h.b16 %v322
        %v741 = vunpack.c.l.b16 %v323
        %v742 = vunpack.c.h.b16 %v323
        %v743 = vunpack.c.l.b16 %v324
        %v744 = vunpack.c.h.b16 %v324
        %v745 = vunpack.c.l.b16 %v325
        %v746 = vunpack.c.l.b16 %v326
        %v747 = vunpack.c.h.b16 %v326
        %v748 = vunpack.c.l.b16 %v327
        %v749 = vunpack.c.h.b16 %v327
        %v750 = vunpack.c.l.b16 %v328
        %v751 = vunpack.c.h.b16 %v328
        %v752 = vunpack.c.l.b16 %v329
        %v753 = vunpack.c.h.b16 %v329
        %v754 = vunpack.c.l.b16 %v330
        %v755 = vunpack.c.l.b16 %v331
        %v756 = vunpack.c.h.b16 %v331
        %v757 = vunpack.c.l.b16 %v332
        %v758 = vunpack.c.h.b16 %v332
        %v759 = vunpack.c.l.b16 %v333
        %v760 = vunpack.c.h.b16 %v333
        %v761 = vunpack.c.l.b16 %v334
        %v762 = vunpack.c.h.b16 %v334
        %v763 = vunpack.c.l.b16 %v335
        %v764 = vunpack.c.l.b16 %v336
        %v765 = vunpack.c.h.b16 %v336
        %v766 = vunpack.c.l.b16 %v337
        %v767 = vunpack.c.h.b16 %v337
        %v768 = vunpack.c.l.b16 %v338
        %v769 = vunpack.c.h.b16 %v338
        %v770 = vunpack.c.l.b16 %v339
        %v771 = vunpack.c.h.b16 %v339
        %v772 = vunpack.c.l.b16 %v340
        %v773 = vunpack.c.l.b16 %v341
        %v774 = vunpack.c.h.b16 %v341
        %v775 = vunpack.c.l.b16 %v342
        %v776 = vunpack.c.h.b16 %v342
        %v777 = vunpack.c.l.b16 %v343
        %v778 = vunpack.c.h.b16 %v343
        %v779 = vunpack.c.l.b16 %v344
        %v780 = vunpack.c.h.b16 %v344
        %v781 = vunpack.c.l.b16 %v345
        %v782 = vunpack.c.l.b16 %v346
        %v783 = vunpack.c.h.b16 %v346
        %v784 = vunpack.c.l.b16 %v347
        %v785 = vunpack.c.h.b16 %v347
        %v786 = vunpack.c.l.b16 %v348
        %v787 = vunpack.c.h.b16 %v348
        %v788 = vunpack.c.l.b16 %v349
        %v789 = vunpack.c.h.b16 %v349
        %v790 = vunpack.c.l.b16 %v350
        %v791 = vunpack.c.l.b16 %v351
        %v792 = vunpack.c.h.b16 %v351
        %v793 = vunpack.c.l.b16 %v352
        %v794 = vunpack.c.h.b16 %v352
        %v795 = vunpack.c.l.b16 %v353
        %v796 = vunpack.c.h.b16 %v353
        %v797 = vunpack.c.l.b16 %v354
        %v798 = vunpack.c.h.b16 %v354
        %v799 = vunpack.c.l.b16 %v355
        %v800 = vunpack.c.l.b16 %v356
        %v801 = vunpack.c.h.b16 %v356
        %v802 = vunpack.c.l.b16 %v357
        %v803 = vunpack.c.h.b16 %v357
        %v804 = vunpack.c.l.b16 %v358
        %v805 = vunpack.c.h.b16 %v358
        %v806 = vunpack.c.l.b16 %v359
        %v807 = vunpack.c.h.b16 %v359
        %v808 = vunpack.c.l.b16 %v360
        %v809 = vunpack.c.l.b16 %v361
        %v810 = vunpack.c.h.b16 %v361
        %v811 = vunpack.c.l.b16 %v362
        %v812 = vunpack.c.h.b16 %v362
        %v813 = vunpack.c.l.b16 %v363
        %v814 = vunpack.c.h.b16 %v363
        %v815 = vunpack.c.l.b16 %v364
        %v816 = vunpack.c.h.b16 %v364
        %v817 = vunpack.c.l.b16 %v365
        %v818 = vunpack.c.l.b16 %v366
        %v819 = vunpack.c.h.b16 %v366
        %v820 = vunpack.c.l.b16 %v367
        %v821 = vunpack.c.h.b16 %v367
        %v822 = vunpack.c.l.b16 %v368
        %v823 = vunpack.c.h.b16 %v368
        %v824 = vunpack.c.l.b16 %v369
        %v825 = vunpack.c.h.b16 %v369
        %v826 = vunpack.c.l.b16 %v370
        %v827 = vunpack.c.l.b16 %v371
        %v828 = vunpack.c.h.b16 %v371
        %v829 = vunpack.c.l.b16 %v372
        %v830 = vunpack.c.h.b16 %v372
        %v831 = vunpack.c.l.b16 %v373
        %v832 = vunpack.c.h.b16 %v373
        %v833 = vunpack.c.l.b16 %v374
        %v834 = vunpack.c.h.b16 %v374
        %v835 = vunpack.c.l.b16 %v375
        %v836 = vunpack.c.l.b16 %v376
        %v837 = vunpack.c.h.b16 %v376
        %v838 = vunpack.c.l.b16 %v377
        %v839 = vunpack.c.h.b16 %v377
        %v840 = vunpack.c.l.b16 %v378
        %v841 = vunpack.c.h.b16 %v378
        %v842 = vunpack.c.l.b16 %v379
        %v843 = vunpack.c.h.b16 %v379
        %v844 = vunpack.c.l.b16 %v380
        %v845 = vunpack.c.l.b16 %v381
        %v846 = vunpack.c.h.b16 %v381
        %v847 = vunpack.c.l.b16 %v382
        %v848 = vunpack.c.h.b16 %v382
        %v849 = vunpack.c.l.b16 %v383
        %v850 = vunpack.c.h.b16 %v383
        %v851 = vunpack.c.l.b16 %v384
        %v852 = vunpack.c.h.b16 %v384
        %v853 = vunpack.c.l.b16 %v385
        %v854 = vunpack.c.l.b16 %v386
        %v855 = vunpack.c.h.b16 %v386
        %v856 = vunpack.c.l.b16 %v387
        %v857 = vunpack.c.h.b16 %v387
        %v858 = vunpack.c.l.b16 %v388
        %v859 = vunpack.c.h.b16 %v388
        %v860 = vunpack.c.l.b16 %v389
        %v861 = vunpack.c.h.b16 %v389
        %v862 = vunpack.c.l.b16 %v390
        %v863 = vunpack.c.l.b16 %v391
        %v864 = vunpack.c.h.b16 %v391
        %v865 = vunpack.c.l.b16 %v392
        %v866 = vunpack.c.h.b16 %v392
        %v867 = vunpack.c.l.b16 %v393
        %v868 = vunpack.c.h.b16 %v393
        %v869 = vunpack.c.l.b16 %v394
        %v870 = vunpack.c.h.b16 %v394
        %v871 = vunpack.c.l.b16 %v395
        %v872 = vunpack.c.l.b16 %v396
        %v873 = vunpack.c.h.b16 %v396
        %v874 = vunpack.c.l.b16 %v397
        %v875 = vunpack.c.h.b16 %v397
        %v876 = vunpack.c.l.b16 %v398
        %v877 = vunpack.c.h.b16 %v398
        %v878 = vunpack.c.l.b16 %v399
        %v879 = vunpack.c.h.b16 %v399
        %v880 = vunpack.c.l.b16 %v400
        %v881 = vunpack.c.l.b16 %v401
        %v882 = vunpack.c.h.b16 %v401
        %v883 = vunpack.c.l.b16 %v402
        %v884 = vunpack.c.h.b16 %v402
        %v885 = vunpack.c.l.b16 %v403
        %v886 = vunpack.c.h.b16 %v403
        %v887 = vunpack.c.l.b16 %v404
        %v888 = vunpack.c.h.b16 %v404
        %v889 = vunpack.c.l.b16 %v405
        %v890 = vunpack.c.l.b16 %v406
        %v891 = vunpack.c.h.b16 %v406
        %v892 = vunpack.c.l.b16 %v407
        %v893 = vunpack.c.h.b16 %v407
        %v894 = vunpack.c.l.b16 %v408
        %v895 = vunpack.c.h.b16 %v408
        %v896 = vunpack.c.l.b16 %v409
        %v897 = vunpack.c.h.b16 %v409
        %v898 = vunpack.c.l.b16 %v410
        %v899 = vunpack.c.l.b16 %v411
        %v900 = vunpack.c.h.b16 %v411
        %v901 = vunpack.c.l.b16 %v412
        %v902 = vunpack.c.h.b16 %v412
        %v903 = vunpack.c.l.b16 %v413
        %v904 = vunpack.c.h.b16 %v413
        %v905 = vunpack.c.l.b16 %v414
        %v906 = vunpack.c.h.b16 %v414
        %v907 = vunpack.c.l.b16 %v415
        %v908 = vunpack.c.l.b16 %v416
        %v909 = vunpack.c.h.b16 %v416
        %v910 = vunpack.c.l.b16 %v417
        %v911 = vunpack.c.h.b16 %v417
        %v912 = vunpack.c.l.b16 %v418
        %v913 = vunpack.c.h.b16 %v418
        %v914 = vunpack.c.l.b16 %v419
        %v915 = vunpack.c.h.b16 %v419
        %v916 = vunpack.c.l.b16 %v420
        %v917 = vunpack.c.l.b16 %v421
        %v918 = vunpack.c.h.b16 %v421
        %v919 = vunpack.c.l.b16 %v422
        %v920 = vunpack.c.h.b16 %v422
        %v921 = vunpack.c.l.b16 %v423
        %v922 = vunpack.c.h.b16 %v423
        %v923 = vunpack.c.l.b16 %v424
        %v924 = vunpack.c.h.b16 %v424
        %v925 = vunpack.c.l.b16 %v425
        %v926 = vunpack.c.l.b16 %v426
        %v927 = vunpack.c.h.b16 %v426
        %v928 = vunpack.c.l.b16 %v427
        %v929 = vunpack.c.h.b16 %v427
        %v930 = vunpack.c.l.b16 %v428
        %v931 = vunpack.c.h.b16 %v428
        %v932 = vunpack.c.l.b16 %v429
        %v933 = vunpack.c.h.b16 %v429
        %v934 = vunpack.c.l.b16 %v430
        %v935 = vunpack.c.l.b16 %v431
        %v936 = vunpack.c.h.b16 %v431
        %v937 = vunpack.c.l.b16 %v432
        %v938 = vunpack.c.h.b16 %v432
        %v939 = vunpack.c.l.b16 %v433
        %v940 = vunpack.c.h.b16 %v433
        %v941 = vunpack.c.l.b16 %v434
        %v942 = vunpack.c.h.b16 %v434
        %v943 = vunpack.c.l.b16 %v435
        %v944 = vunpack.c.l.b16 %v436
        %v945 = vunpack.c.h.b16 %v436
        %v946 = vunpack.c.l.b16 %v437
        %v947 = vunpack.c.h.b16 %v437
        %v948 = vunpack.c.l.b16 %v438
        %v949 = vunpack.c.h.b16 %v438
        %v950 = vunpack.c.l.b16 %v439
        %v951 = vunpack.c.h.b16 %v439
        %v952 = vunpack.c.l.b16 %v440
        %v953 = vunpack.c.l.b16 %v441
        %v954 = vunpack.c.h.b16 %v441
        %v955 = vunpack.c.l.b16 %v442
        %v956 = vunpack.c.h.b16 %v442
        %v957 = vunpack.c.l.b16 %v443
        %v958 = vunpack.c.h.b16 %v443
        %v959 = vunpack.c.l.b16 %v444
        %v960 = vunpack.c.h.b16 %v444
        %v961 = vunpack.c.l.b16 %v445
        %v962 = vunpack.c.l.b16 %v446
        %v963 = vunpack.c.h.b16 %v446
        %v964 = vunpack.c.l.b16 %v447
        %v965 = vunpack.c.h.b16 %v447
        %v966 = vunpack.c.l.b16 %v448
        %v967 = vunpack.c.h.b16 %v448
        %v968 = vunpack.c.l.b16 %v449
        %v969 = vunpack.c.h.b16 %v449
        %v970 = vunpack.c.l.b16 %v450
        %v971 = vunpack.c.l.b16 %v451
        %v972 = vunpack.c.h.b16 %v451
        %v973 = vunpack.c.l.b16 %v452
        %v974 = vunpack.c.h.b16 %v452
        %v975 = vunpack.c.l.b16 %v453
        %v976 = vunpack.c.h.b16 %v453
        %v977 = vunpack.c.l.b16 %v454
        %v978 = vunpack.c.h.b16 %v454
        %v979 = vunpack.c.l.b16 %v455
        %v980 = vunpack.c.l.b16 %v456
        %v981 = vunpack.c.h.b16 %v456
        %v982 = vunpack.c.l.b16 %v457
        %v983 = vunpack.c.h.b16 %v457
        %v984 = vunpack.c.l.b16 %v458
        %v985 = vunpack.c.h.b16 %v458
        %v986 = vunpack.c.l.b16 %v459
        %v987 = vunpack.c.h.b16 %v459
        %v988 = vunpack.c.l.b16 %v460
        %v989 = vpack.c.b16 %v710, %v701
        %v990 = vpack.c.b16 %v711, %v702
        %v991 = vpack.c.b16 %v712, %v703
        %v992 = vpack.c.b16 %v713, %v704
        %v993 = vpack.c.b16 %v714, %v705
        %v994 = vpack.c.b16 %v715, %v706
        %v995 = vpack.c.b16 %v716, %v707
        %v996 = vpack.c.b16 %v717, %v708
        %v997 = vpack.c.b16 %v718, %v709
        %v998 = vpack.c.b16 %v728, %v719
        %v999 = vpack.c.b16 %v729, %v720
        %v1000 = vpack.c.b16 %v730, %v721
        %v1001 = vpack.c.b16 %v731, %v722
        %v1002 = vpack.c.b16 %v732, %v723
        %v1003 = vpack.c.b16 %v733, %v724
        %v1004 = vpack.c.b16 %v734, %v725
        %v1005 = vpack.c.b16 %v735, %v726
        %v1006 = vpack.c.b16 %v736, %v727
        %v1007 = vpack.c.b16 %v746, %v737
        %v1008 = vpack.c.b16 %v747, %v738
        %v1009 = vpack.c.b16 %v748, %v739
        %v1010 = vpack.c.b16 %v749, %v740
        %v1011 = vpack.c.b16 %v750, %v741
        %v1012 = vpack.c.b16 %v751, %v742
        %v1013 = vpack.c.b16 %v752, %v743
        %v1014 = vpack.c.b16 %v753, %v744
        %v1015 = vpack.c.b16 %v754, %v745
        %v1016 = vpack.c.b16 %v764, %v755
        %v1017 = vpack.c.b16 %v765, %v756
        %v1018 = vpack.c.b16 %v766, %v757
        %v1019 = vpack.c.b16 %v767, %v758
        %v1020 = vpack.c.b16 %v768, %v759
        %v1021 = vpack.c.b16 %v769, %v760
        %v1022 = vpack.c.b16 %v770, %v761
        %v1023 = vpack.c.b16 %v771, %v762
        %v1024 = vpack.c.b16 %v772, %v763
        %v1025 = vpack.c.b16 %v782, %v773
        %v1026 = vpack.c.b16 %v783, %v774
        %v1027 = vpack.c.b16 %v784, %v775
        %v1028 = vpack.c.b16 %v785, %v776
        %v1029 = vpack.c.b16 %v786, %v777
        %v1030 = vpack.c.b16 %v787, %v778
        %v1031 = vpack.c.b16 %v788, %v779
        %v1032 = vpack.c.b16 %v789, %v780
        %v1033 = vpack.c.b16 %v790, %v781
        %v1034 = vpack.c.b16 %v800, %v791
        %v1035 = vpack.c.b16 %v801, %v792
        %v1036 = vpack.c.b16 %v802, %v793
        %v1037 = vpack.c.b16 %v803, %v794
        %v1038 = vpack.c.b16 %v804, %v795
        %v1039 = vpack.c.b16 %v805, %v796
        %v1040 = vpack.c.b16 %v806, %v797
        %v1041 = vpack.c.b16 %v807, %v798
        %v1042 = vpack.c.b16 %v808, %v799
        %v1043 = vpack.c.b16 %v818, %v809
        %v1044 = vpack.c.b16 %v819, %v810
        %v1045 = vpack.c.b16 %v820, %v811
        %v1046 = vpack.c.b16 %v821, %v812
        %v1047 = vpack.c.b16 %v822, %v813
        %v1048 = vpack.c.b16 %v823, %v814
        %v1049 = vpack.c.b16 %v824, %v815
        %v1050 = vpack.c.b16 %v825, %v816
        %v1051 = vpack.c.b16 %v826, %v817
        %v1052 = vpack.c.b16 %v836, %v827
        %v1053 = vpack.c.b16 %v837, %v828
        %v1054 = vpack.c.b16 %v838, %v829
        %v1055 = vpack.c.b16 %v839, %v830
        %v1056 = vpack.c.b16 %v840, %v831
        %v1057 = vpack.c.b16 %v841, %v832
        %v1058 = vpack.c.b16 %v842, %v833
        %v1059 = vpack.c.b16 %v843, %v834
        %v1060 = vpack.c.b16 %v844, %v835
        %v1061 = vpack.c.b16 %v854, %v845
        %v1062 = vpack.c.b16 %v855, %v846
        %v1063 = vpack.c.b16 %v856, %v847
        %v1064 = vpack.c.b16 %v857, %v848
        %v1065 = vpack.c.b16 %v858, %v849
        %v1066 = vpack.c.b16 %v859, %v850
        %v1067 = vpack.c.b16 %v860, %v851
        %v1068 = vpack.c.b16 %v861, %v852
        %v1069 = vpack.c.b16 %v862, %v853
        %v1070 = vpack.c.b16 %v872, %v863
        %v1071 = vpack.c.b16 %v873, %v864
        %v1072 = vpack.c.b16 %v874, %v865
        %v1073 = vpack.c.b16 %v875, %v866
        %v1074 = vpack.c.b16 %v876, %v867
        %v1075 = vpack.c.b16 %v877, %v868
        %v1076 = vpack.c.b16 %v878, %v869
        %v1077 = vpack.c.b16 %v879, %v870
        %v1078 = vpack.c.b16 %v880, %v871
        %v1079 = vpack.c.b16 %v890, %v881
        %v1080 = vpack.c.b16 %v891, %v882
        %v1081 = vpack.c.b16 %v892, %v883
        %v1082 = vpack.c.b16 %v893, %v884
        %v1083 = vpack.c.b16 %v894, %v885
        %v1084 = vpack.c.b16 %v895, %v886
        %v1085 = vpack.c.b16 %v896, %v887
        %v1086 = vpack.c.b16 %v897, %v888
        %v1087 = vpack.c.b16 %v898, %v889
        %v1088 = vpack.c.b16 %v908, %v899
        %v1089 = vpack.c.b16 %v909, %v900
        %v1090 = vpack.c.b16 %v910, %v901
        %v1091 = vpack.c.b16 %v911, %v902
        %v1092 = vpack.c.b16 %v912, %v903
        %v1093 = vpack.c.b16 %v913, %v904
        %v1094 = vpack.c.b16 %v914, %v905
        %v1095 = vpack.c.b16 %v915, %v906
        %v1096 = vpack.c.b16 %v916, %v907
        %v1097 = vpack.c.b16 %v926, %v917
        %v1098 = vpack.c.b16 %v927, %v918
        %v1099 = vpack.c.b16 %v928, %v919
        %v1100 = vpack.c.b16 %v929, %v920
        %v1101 = vpack.c.b16 %v930, %v921
        %v1102 = vpack.c.b16 %v931, %v922
        %v1103 = vpack.c.b16 %v932, %v923
        %v1104 = vpack.c.b16 %v933, %v924
        %v1105 = vpack.c.b16 %v934, %v925
        %v1106 = vpack.c.b16 %v944, %v935
        %v1107 = vpack.c.b16 %v945, %v936
        %v1108 = vpack.c.b16 %v946, %v937
        %v1109 = vpack.c.b16 %v947, %v938
        %v1110 = vpack.c.b16 %v948, %v939
        %v1111 = vpack.c.b16 %v949, %v940
        %v1112 = vpack.c.b16 %v950, %v941
        %v1113 = vpack.c.b16 %v951, %v942
        %v1114 = vpack.c.b16 %v952, %v943
        %v1115 = vpack.c.b16 %v962, %v953
        %v1116 = vpack.c.b16 %v963, %v954
        %v1117 = vpack.c.b16 %v964, %v955
        %v1118 = vpack.c.b16 %v965, %v956
        %v1119 = vpack.c.b16 %v966, %v957
        %v1120 = vpack.c.b16 %v967, %v958
        %v1121 = vpack.c.b16 %v968, %v959
        %v1122 = vpack.c.b16 %v969, %v960
        %v1123 = vpack.c.b16 %v970, %v961
        %v1124 = vpack.c.b16 %v980, %v971
        %v1125 = vpack.c.b16 %v981, %v972
        %v1126 = vpack.c.b16 %v982, %v973
        %v1127 = vpack.c.b16 %v983, %v974
        %v1128 = vpack.c.b16 %v984, %v975
        %v1129 = vpack.c.b16 %v985, %v976
        %v1130 = vpack.c.b16 %v986, %v977
        %v1131 = vpack.c.b16 %v987, %v978
        %v1132 = vpack.c.b16 %v988, %v979
        %1277 = vmatpush.bf16.msra.mxu0 %v1052
        %1278 = vmatpush.bf16.msra.mxu0 %v1043
        %1279 = vmatpush.bf16.msra.mxu0 %v1034
        %1280 = vmatpush.bf16.msra.mxu0 %v1025
        %1281 = vmatpush.bf16.msra.mxu0 %v1016
        %1282 = vmatpush.bf16.msra.mxu0 %v1007
        %1283 = vmatpush.bf16.msra.mxu0 %v998
        %1284 = vmatpush.bf16.msra.mxu0 %v989
        %1285 = vmatmul.bf16.gmra.mxu0 %v509
        %v1286 = vpop.f32.mrf.mxu0
        %v1287 = vadd.f32 0.0, %v1286
        %v1288 = vpop.f32.mrf.mxu0
        %v1289 = vadd.f32 0.0, %v1288
        %1290 = vmatmul.bf16.gmra.mxu0 %v511
        %v1291 = vpop.f32.mrf.mxu0
        %v1292 = vadd.f32 0.0, %v1291
        %v1293 = vpop.f32.mrf.mxu0
        %v1294 = vadd.f32 0.0, %v1293
        %1295 = vmatmul.bf16.gmra.mxu0 %v513
        %v1296 = vpop.f32.mrf.mxu0
        %v1297 = vadd.f32 0.0, %v1296
        %v1298 = vpop.f32.mrf.mxu0
        %v1299 = vadd.f32 0.0, %v1298
        %1300 = vmatmul.bf16.gmra.mxu0 %v515
        %v1301 = vpop.f32.mrf.mxu0
        %v1302 = vadd.f32 0.0, %v1301
        %v1303 = vpop.f32.mrf.mxu0
        %v1304 = vadd.f32 0.0, %v1303
        %1305 = vmatmul.bf16.gmra.mxu0 %v517
        %v1306 = vpop.f32.mrf.mxu0
        %v1307 = vadd.f32 0.0, %v1306
        %v1308 = vpop.f32.mrf.mxu0
        %v1309 = vadd.f32 0.0, %v1308
        %1310 = vmatmul.bf16.gmra.mxu0 %v519
        %v1311 = vpop.f32.mrf.mxu0
        %v1312 = vadd.f32 0.0, %v1311
        %v1313 = vpop.f32.mrf.mxu0
        %v1314 = vadd.f32 0.0, %v1313
        %1315 = vmatmul.bf16.gmra.mxu0 %v521
        %v1316 = vpop.f32.mrf.mxu0
        %v1317 = vadd.f32 0.0, %v1316
        %v1318 = vpop.f32.mrf.mxu0
        %v1319 = vadd.f32 0.0, %v1318
        %1320 = vmatmul.bf16.gmra.mxu0 %v523
        %v1321 = vpop.f32.mrf.mxu0
        %v1322 = vadd.f32 0.0, %v1321
        %v1323 = vpop.f32.mrf.mxu0
        %v1324 = vadd.f32 0.0, %v1323
        %1325 = vdwg.mxu0
        %1326 = vmatpush.bf16.msra.mxu0 %v1124
        %1327 = vmatpush.bf16.msra.mxu0 %v1115
        %1328 = vmatpush.bf16.msra.mxu0 %v1106
        %1329 = vmatpush.bf16.msra.mxu0 %v1097
        %1330 = vmatpush.bf16.msra.mxu0 %v1088
        %1331 = vmatpush.bf16.msra.mxu0 %v1079
        %1332 = vmatpush.bf16.msra.mxu0 %v1070
        %1333 = vmatpush.bf16.msra.mxu0 %v1061
        %1334 = vmatmul.bf16.gmra.mxu0 %v510
        %v1335 = vpop.f32.mrf.mxu0
        %v1336 = vadd.f32 %v1287, %v1335
        %v1337 = vpop.f32.mrf.mxu0
        %v1338 = vadd.f32 %v1289, %v1337
        %1339 = vmatmul.bf16.gmra.mxu0 %v512
        %v1340 = vpop.f32.mrf.mxu0
        %v1341 = vadd.f32 %v1292, %v1340
        %v1342 = vpop.f32.mrf.mxu0
        %v1343 = vadd.f32 %v1294, %v1342
        %1344 = vmatmul.bf16.gmra.mxu0 %v514
        %v1345 = vpop.f32.mrf.mxu0
        %v1346 = vadd.f32 %v1297, %v1345
        %v1347 = vpop.f32.mrf.mxu0
        %v1348 = vadd.f32 %v1299, %v1347
        %1349 = vmatmul.bf16.gmra.mxu0 %v516
        %v1350 = vpop.f32.mrf.mxu0
        %v1351 = vadd.f32 %v1302, %v1350
        %v1352 = vpop.f32.mrf.mxu0
        %v1353 = vadd.f32 %v1304, %v1352
        %1354 = vmatmul.bf16.gmra.mxu0 %v518
        %v1355 = vpop.f32.mrf.mxu0
        %v1356 = vadd.f32 %v1307, %v1355
        %v1357 = vpop.f32.mrf.mxu0
        %v1358 = vadd.f32 %v1309, %v1357
        %1359 = vmatmul.bf16.gmra.mxu0 %v520
        %v1360 = vpop.f32.mrf.mxu0
        %v1361 = vadd.f32 %v1312, %v1360
        %v1362 = vpop.f32.mrf.mxu0
        %v1363 = vadd.f32 %v1314, %v1362
        %1364 = vmatmul.bf16.gmra.mxu0 %v522
        %v1365 = vpop.f32.mrf.mxu0
        %v1366 = vadd.f32 %v1317, %v1365
        %v1367 = vpop.f32.mrf.mxu0
        %v1368 = vadd.f32 %v1319, %v1367
        %1369 = vmatmul.bf16.gmra.mxu0 %v524
        %v1370 = vpop.f32.mrf.mxu0
        %v1371 = vadd.f32 %v1322, %v1370
        %v1372 = vpop.f32.mrf.mxu0
        %v1373 = vadd.f32 %v1324, %v1372
        %1374 = vdwg.mxu0
        %1375 = vmatpush.bf16.msra.mxu0 %v1053
        %1376 = vmatpush.bf16.msra.mxu0 %v1044
        %1377 = vmatpush.bf16.msra.mxu0 %v1035
        %1378 = vmatpush.bf16.msra.mxu0 %v1026
        %1379 = vmatpush.bf16.msra.mxu0 %v1017
        %1380 = vmatpush.bf16.msra.mxu0 %v1008
        %1381 = vmatpush.bf16.msra.mxu0 %v999
        %1382 = vmatpush.bf16.msra.mxu0 %v990
        %1383 = vmatmul.bf16.gmra.mxu0 %v509
        %v1384 = vpop.f32.mrf.mxu0
        %v1385 = vadd.f32 0.0, %v1384
        %v1386 = vpop.f32.mrf.mxu0
        %v1387 = vadd.f32 0.0, %v1386
        %1388 = vmatmul.bf16.gmra.mxu0 %v511
        %v1389 = vpop.f32.mrf.mxu0
        %v1390 = vadd.f32 0.0, %v1389
        %v1391 = vpop.f32.mrf.mxu0
        %v1392 = vadd.f32 0.0, %v1391
        %1393 = vmatmul.bf16.gmra.mxu0 %v513
        %v1394 = vpop.f32.mrf.mxu0
        %v1395 = vadd.f32 0.0, %v1394
        %v1396 = vpop.f32.mrf.mxu0
        %v1397 = vadd.f32 0.0, %v1396
        %1398 = vmatmul.bf16.gmra.mxu0 %v515
        %v1399 = vpop.f32.mrf.mxu0
        %v1400 = vadd.f32 0.0, %v1399
        %v1401 = vpop.f32.mrf.mxu0
        %v1402 = vadd.f32 0.0, %v1401
        %1403 = vmatmul.bf16.gmra.mxu0 %v517
        %v1404 = vpop.f32.mrf.mxu0
        %v1405 = vadd.f32 0.0, %v1404
        %v1406 = vpop.f32.mrf.mxu0
        %v1407 = vadd.f32 0.0, %v1406
        %1408 = vmatmul.bf16.gmra.mxu0 %v519
        %v1409 = vpop.f32.mrf.mxu0
        %v1410 = vadd.f32 0.0, %v1409
        %v1411 = vpop.f32.mrf.mxu0
        %v1412 = vadd.f32 0.0, %v1411
        %1413 = vmatmul.bf16.gmra.mxu0 %v521
        %v1414 = vpop.f32.mrf.mxu0
        %v1415 = vadd.f32 0.0, %v1414
        %v1416 = vpop.f32.mrf.mxu0
        %v1417 = vadd.f32 0.0, %v1416
        %1418 = vmatmul.bf16.gmra.mxu0 %v523
        %v1419 = vpop.f32.mrf.mxu0
        %v1420 = vadd.f32 0.0, %v1419
        %v1421 = vpop.f32.mrf.mxu0
        %v1422 = vadd.f32 0.0, %v1421
        %1423 = vdwg.mxu0
        %1424 = vmatpush.bf16.msra.mxu0 %v1125
        %1425 = vmatpush.bf16.msra.mxu0 %v1116
        %1426 = vmatpush.bf16.msra.mxu0 %v1107
        %1427 = vmatpush.bf16.msra.mxu0 %v1098
        %1428 = vmatpush.bf16.msra.mxu0 %v1089
        %1429 = vmatpush.bf16.msra.mxu0 %v1080
        %1430 = vmatpush.bf16.msra.mxu0 %v1071
        %1431 = vmatpush.bf16.msra.mxu0 %v1062
        %1432 = vmatmul.bf16.gmra.mxu0 %v510
        %v1433 = vpop.f32.mrf.mxu0
        %v1434 = vadd.f32 %v1385, %v1433
        %v1435 = vpop.f32.mrf.mxu0
        %v1436 = vadd.f32 %v1387, %v1435
        %1437 = vmatmul.bf16.gmra.mxu0 %v512
        %v1438 = vpop.f32.mrf.mxu0
        %v1439 = vadd.f32 %v1390, %v1438
        %v1440 = vpop.f32.mrf.mxu0
        %v1441 = vadd.f32 %v1392, %v1440
        %1442 = vmatmul.bf16.gmra.mxu0 %v514
        %v1443 = vpop.f32.mrf.mxu0
        %v1444 = vadd.f32 %v1395, %v1443
        %v1445 = vpop.f32.mrf.mxu0
        %v1446 = vadd.f32 %v1397, %v1445
        %1447 = vmatmul.bf16.gmra.mxu0 %v516
        %v1448 = vpop.f32.mrf.mxu0
        %v1449 = vadd.f32 %v1400, %v1448
        %v1450 = vpop.f32.mrf.mxu0
        %v1451 = vadd.f32 %v1402, %v1450
        %1452 = vmatmul.bf16.gmra.mxu0 %v518
        %v1453 = vpop.f32.mrf.mxu0
        %v1454 = vadd.f32 %v1405, %v1453
        %v1455 = vpop.f32.mrf.mxu0
        %v1456 = vadd.f32 %v1407, %v1455
        %1457 = vmatmul.bf16.gmra.mxu0 %v520
        %v1458 = vpop.f32.mrf.mxu0
        %v1459 = vadd.f32 %v1410, %v1458
        %v1460 = vpop.f32.mrf.mxu0
        %v1461 = vadd.f32 %v1412, %v1460
        %1462 = vmatmul.bf16.gmra.mxu0 %v522
        %v1463 = vpop.f32.mrf.mxu0
        %v1464 = vadd.f32 %v1415, %v1463
        %v1465 = vpop.f32.mrf.mxu0
        %v1466 = vadd.f32 %v1417, %v1465
        %1467 = vmatmul.bf16.gmra.mxu0 %v524
        %v1468 = vpop.f32.mrf.mxu0
        %v1469 = vadd.f32 %v1420, %v1468
        %v1470 = vpop.f32.mrf.mxu0
        %v1471 = vadd.f32 %v1422, %v1470
        %1472 = vdwg.mxu0
        %1473 = vmatpush.bf16.msra.mxu0 %v1054
        %1474 = vmatpush.bf16.msra.mxu0 %v1045
        %1475 = vmatpush.bf16.msra.mxu0 %v1036
        %1476 = vmatpush.bf16.msra.mxu0 %v1027
        %1477 = vmatpush.bf16.msra.mxu0 %v1018
        %1478 = vmatpush.bf16.msra.mxu0 %v1009
        %1479 = vmatpush.bf16.msra.mxu0 %v1000
        %1480 = vmatpush.bf16.msra.mxu0 %v991
        %1481 = vmatmul.bf16.gmra.mxu0 %v509
        %v1482 = vpop.f32.mrf.mxu0
        %v1483 = vadd.f32 0.0, %v1482
        %v1484 = vpop.f32.mrf.mxu0
        %v1485 = vadd.f32 0.0, %v1484
        %1486 = vmatmul.bf16.gmra.mxu0 %v511
        %v1487 = vpop.f32.mrf.mxu0
        %v1488 = vadd.f32 0.0, %v1487
        %v1489 = vpop.f32.mrf.mxu0
        %v1490 = vadd.f32 0.0, %v1489
        %1491 = vmatmul.bf16.gmra.mxu0 %v513
        %v1492 = vpop.f32.mrf.mxu0
        %v1493 = vadd.f32 0.0, %v1492
        %v1494 = vpop.f32.mrf.mxu0
        %v1495 = vadd.f32 0.0, %v1494
        %1496 = vmatmul.bf16.gmra.mxu0 %v515
        %v1497 = vpop.f32.mrf.mxu0
        %v1498 = vadd.f32 0.0, %v1497
        %v1499 = vpop.f32.mrf.mxu0
        %v1500 = vadd.f32 0.0, %v1499
        %1501 = vmatmul.bf16.gmra.mxu0 %v517
        %v1502 = vpop.f32.mrf.mxu0
        %v1503 = vadd.f32 0.0, %v1502
        %v1504 = vpop.f32.mrf.mxu0
        %v1505 = vadd.f32 0.0, %v1504
        %1506 = vmatmul.bf16.gmra.mxu0 %v519
        %v1507 = vpop.f32.mrf.mxu0
        %v1508 = vadd.f32 0.0, %v1507
        %v1509 = vpop.f32.mrf.mxu0
        %v1510 = vadd.f32 0.0, %v1509
        %1511 = vmatmul.bf16.gmra.mxu0 %v521
        %v1512 = vpop.f32.mrf.mxu0
        %v1513 = vadd.f32 0.0, %v1512
        %v1514 = vpop.f32.mrf.mxu0
        %v1515 = vadd.f32 0.0, %v1514
        %1516 = vmatmul.bf16.gmra.mxu0 %v523
        %v1517 = vpop.f32.mrf.mxu0
        %v1518 = vadd.f32 0.0, %v1517
        %v1519 = vpop.f32.mrf.mxu0
        %v1520 = vadd.f32 0.0, %v1519
        %1521 = vdwg.mxu0
        %1522 = vmatpush.bf16.msra.mxu0 %v1126
        %1523 = vmatpush.bf16.msra.mxu0 %v1117
        %1524 = vmatpush.bf16.msra.mxu0 %v1108
        %1525 = vmatpush.bf16.msra.mxu0 %v1099
        %1526 = vmatpush.bf16.msra.mxu0 %v1090
        %1527 = vmatpush.bf16.msra.mxu0 %v1081
        %1528 = vmatpush.bf16.msra.mxu0 %v1072
        %1529 = vmatpush.bf16.msra.mxu0 %v1063
        %1530 = vmatmul.bf16.gmra.mxu0 %v510
        %v1531 = vpop.f32.mrf.mxu0
        %v1532 = vadd.f32 %v1483, %v1531
        %v1533 = vpop.f32.mrf.mxu0
        %v1534 = vadd.f32 %v1485, %v1533
        %1535 = vmatmul.bf16.gmra.mxu0 %v512
        %v1536 = vpop.f32.mrf.mxu0
        %v1537 = vadd.f32 %v1488, %v1536
        %v1538 = vpop.f32.mrf.mxu0
        %v1539 = vadd.f32 %v1490, %v1538
        %1540 = vmatmul.bf16.gmra.mxu0 %v514
        %v1541 = vpop.f32.mrf.mxu0
        %v1542 = vadd.f32 %v1493, %v1541
        %v1543 = vpop.f32.mrf.mxu0
        %v1544 = vadd.f32 %v1495, %v1543
        %1545 = vmatmul.bf16.gmra.mxu0 %v516
        %v1546 = vpop.f32.mrf.mxu0
        %v1547 = vadd.f32 %v1498, %v1546
        %v1548 = vpop.f32.mrf.mxu0
        %v1549 = vadd.f32 %v1500, %v1548
        %1550 = vmatmul.bf16.gmra.mxu0 %v518
        %v1551 = vpop.f32.mrf.mxu0
        %v1552 = vadd.f32 %v1503, %v1551
        %v1553 = vpop.f32.mrf.mxu0
        %v1554 = vadd.f32 %v1505, %v1553
        %1555 = vmatmul.bf16.gmra.mxu0 %v520
        %v1556 = vpop.f32.mrf.mxu0
        %v1557 = vadd.f32 %v1508, %v1556
        %v1558 = vpop.f32.mrf.mxu0
        %v1559 = vadd.f32 %v1510, %v1558
        %1560 = vmatmul.bf16.gmra.mxu0 %v522
        %v1561 = vpop.f32.mrf.mxu0
        %v1562 = vadd.f32 %v1513, %v1561
        %v1563 = vpop.f32.mrf.mxu0
        %v1564 = vadd.f32 %v1515, %v1563
        %1565 = vmatmul.bf16.gmra.mxu0 %v524
        %v1566 = vpop.f32.mrf.mxu0
        %v1567 = vadd.f32 %v1518, %v1566
        %v1568 = vpop.f32.mrf.mxu0
        %v1569 = vadd.f32 %v1520, %v1568
        %1570 = vdwg.mxu0
        %1571 = vmatpush.bf16.msra.mxu0 %v1055
        %1572 = vmatpush.bf16.msra.mxu0 %v1046
        %1573 = vmatpush.bf16.msra.mxu0 %v1037
        %1574 = vmatpush.bf16.msra.mxu0 %v1028
        %1575 = vmatpush.bf16.msra.mxu0 %v1019
        %1576 = vmatpush.bf16.msra.mxu0 %v1010
        %1577 = vmatpush.bf16.msra.mxu0 %v1001
        %1578 = vmatpush.bf16.msra.mxu0 %v992
        %1579 = vmatmul.bf16.gmra.mxu0 %v509
        %v1580 = vpop.f32.mrf.mxu0
        %v1581 = vadd.f32 0.0, %v1580
        %v1582 = vpop.f32.mrf.mxu0
        %v1583 = vadd.f32 0.0, %v1582
        %1584 = vmatmul.bf16.gmra.mxu0 %v511
        %v1585 = vpop.f32.mrf.mxu0
        %v1586 = vadd.f32 0.0, %v1585
        %v1587 = vpop.f32.mrf.mxu0
        %v1588 = vadd.f32 0.0, %v1587
        %1589 = vmatmul.bf16.gmra.mxu0 %v513
        %v1590 = vpop.f32.mrf.mxu0
        %v1591 = vadd.f32 0.0, %v1590
        %v1592 = vpop.f32.mrf.mxu0
        %v1593 = vadd.f32 0.0, %v1592
        %1594 = vmatmul.bf16.gmra.mxu0 %v515
        %v1595 = vpop.f32.mrf.mxu0
        %v1596 = vadd.f32 0.0, %v1595
        %v1597 = vpop.f32.mrf.mxu0
        %v1598 = vadd.f32 0.0, %v1597
        %1599 = vmatmul.bf16.gmra.mxu0 %v517
        %v1600 = vpop.f32.mrf.mxu0
        %v1601 = vadd.f32 0.0, %v1600
        %v1602 = vpop.f32.mrf.mxu0
        %v1603 = vadd.f32 0.0, %v1602
        %1604 = vmatmul.bf16.gmra.mxu0 %v519
        %v1605 = vpop.f32.mrf.mxu0
        %v1606 = vadd.f32 0.0, %v1605
        %v1607 = vpop.f32.mrf.mxu0
        %v1608 = vadd.f32 0.0, %v1607
        %1609 = vmatmul.bf16.gmra.mxu0 %v521
        %v1610 = vpop.f32.mrf.mxu0
        %v1611 = vadd.f32 0.0, %v1610
        %v1612 = vpop.f32.mrf.mxu0
        %v1613 = vadd.f32 0.0, %v1612
        %1614 = vmatmul.bf16.gmra.mxu0 %v523
        %v1615 = vpop.f32.mrf.mxu0
        %v1616 = vadd.f32 0.0, %v1615
        %v1617 = vpop.f32.mrf.mxu0
        %v1618 = vadd.f32 0.0, %v1617
        %1619 = vdwg.mxu0
        %1620 = vmatpush.bf16.msra.mxu0 %v1127
        %1621 = vmatpush.bf16.msra.mxu0 %v1118
        %1622 = vmatpush.bf16.msra.mxu0 %v1109
        %1623 = vmatpush.bf16.msra.mxu0 %v1100
        %1624 = vmatpush.bf16.msra.mxu0 %v1091
        %1625 = vmatpush.bf16.msra.mxu0 %v1082
        %1626 = vmatpush.bf16.msra.mxu0 %v1073
        %1627 = vmatpush.bf16.msra.mxu0 %v1064
        %1628 = vmatmul.bf16.gmra.mxu0 %v510
        %v1629 = vpop.f32.mrf.mxu0
        %v1630 = vadd.f32 %v1581, %v1629
        %v1631 = vpop.f32.mrf.mxu0
        %v1632 = vadd.f32 %v1583, %v1631
        %1633 = vmatmul.bf16.gmra.mxu0 %v512
        %v1634 = vpop.f32.mrf.mxu0
        %v1635 = vadd.f32 %v1586, %v1634
        %v1636 = vpop.f32.mrf.mxu0
        %v1637 = vadd.f32 %v1588, %v1636
        %1638 = vmatmul.bf16.gmra.mxu0 %v514
        %v1639 = vpop.f32.mrf.mxu0
        %v1640 = vadd.f32 %v1591, %v1639
        %v1641 = vpop.f32.mrf.mxu0
        %v1642 = vadd.f32 %v1593, %v1641
        %1643 = vmatmul.bf16.gmra.mxu0 %v516
        %v1644 = vpop.f32.mrf.mxu0
        %v1645 = vadd.f32 %v1596, %v1644
        %v1646 = vpop.f32.mrf.mxu0
        %v1647 = vadd.f32 %v1598, %v1646
        %1648 = vmatmul.bf16.gmra.mxu0 %v518
        %v1649 = vpop.f32.mrf.mxu0
        %v1650 = vadd.f32 %v1601, %v1649
        %v1651 = vpop.f32.mrf.mxu0
        %v1652 = vadd.f32 %v1603, %v1651
        %1653 = vmatmul.bf16.gmra.mxu0 %v520
        %v1654 = vpop.f32.mrf.mxu0
        %v1655 = vadd.f32 %v1606, %v1654
        %v1656 = vpop.f32.mrf.mxu0
        %v1657 = vadd.f32 %v1608, %v1656
        %1658 = vmatmul.bf16.gmra.mxu0 %v522
        %v1659 = vpop.f32.mrf.mxu0
        %v1660 = vadd.f32 %v1611, %v1659
        %v1661 = vpop.f32.mrf.mxu0
        %v1662 = vadd.f32 %v1613, %v1661
        %1663 = vmatmul.bf16.gmra.mxu0 %v524
        %v1664 = vpop.f32.mrf.mxu0
        %v1665 = vadd.f32 %v1616, %v1664
        %v1666 = vpop.f32.mrf.mxu0
        %v1667 = vadd.f32 %v1618, %v1666
        %1668 = vdwg.mxu0
        %1669 = vmatpush.bf16.msra.mxu0 %v1056
        %1670 = vmatpush.bf16.msra.mxu0 %v1047
        %1671 = vmatpush.bf16.msra.mxu0 %v1038
        %1672 = vmatpush.bf16.msra.mxu0 %v1029
        %1673 = vmatpush.bf16.msra.mxu0 %v1020
        %1674 = vmatpush.bf16.msra.mxu0 %v1011
        %1675 = vmatpush.bf16.msra.mxu0 %v1002
        %1676 = vmatpush.bf16.msra.mxu0 %v993
        %1677 = vmatmul.bf16.gmra.mxu0 %v509
        %v1678 = vpop.f32.mrf.mxu0
        %v1679 = vadd.f32 0.0, %v1678
        %v1680 = vpop.f32.mrf.mxu0
        %v1681 = vadd.f32 0.0, %v1680
        %1682 = vmatmul.bf16.gmra.mxu0 %v511
        %v1683 = vpop.f32.mrf.mxu0
        %v1684 = vadd.f32 0.0, %v1683
        %v1685 = vpop.f32.mrf.mxu0
        %v1686 = vadd.f32 0.0, %v1685
        %1687 = vmatmul.bf16.gmra.mxu0 %v513
        %v1688 = vpop.f32.mrf.mxu0
        %v1689 = vadd.f32 0.0, %v1688
        %v1690 = vpop.f32.mrf.mxu0
        %v1691 = vadd.f32 0.0, %v1690
        %1692 = vmatmul.bf16.gmra.mxu0 %v515
        %v1693 = vpop.f32.mrf.mxu0
        %v1694 = vadd.f32 0.0, %v1693
        %v1695 = vpop.f32.mrf.mxu0
        %v1696 = vadd.f32 0.0, %v1695
        %1697 = vmatmul.bf16.gmra.mxu0 %v517
        %v1698 = vpop.f32.mrf.mxu0
        %v1699 = vadd.f32 0.0, %v1698
        %v1700 = vpop.f32.mrf.mxu0
        %v1701 = vadd.f32 0.0, %v1700
        %1702 = vmatmul.bf16.gmra.mxu0 %v519
        %v1703 = vpop.f32.mrf.mxu0
        %v1704 = vadd.f32 0.0, %v1703
        %v1705 = vpop.f32.mrf.mxu0
        %v1706 = vadd.f32 0.0, %v1705
        %1707 = vmatmul.bf16.gmra.mxu0 %v521
        %v1708 = vpop.f32.mrf.mxu0
        %v1709 = vadd.f32 0.0, %v1708
        %v1710 = vpop.f32.mrf.mxu0
        %v1711 = vadd.f32 0.0, %v1710
        %1712 = vmatmul.bf16.gmra.mxu0 %v523
        %v1713 = vpop.f32.mrf.mxu0
        %v1714 = vadd.f32 0.0, %v1713
        %v1715 = vpop.f32.mrf.mxu0
        %v1716 = vadd.f32 0.0, %v1715
        %1717 = vdwg.mxu0
        %1718 = vmatpush.bf16.msra.mxu0 %v1128
        %1719 = vmatpush.bf16.msra.mxu0 %v1119
        %1720 = vmatpush.bf16.msra.mxu0 %v1110
        %1721 = vmatpush.bf16.msra.mxu0 %v1101
        %1722 = vmatpush.bf16.msra.mxu0 %v1092
        %1723 = vmatpush.bf16.msra.mxu0 %v1083
        %1724 = vmatpush.bf16.msra.mxu0 %v1074
        %1725 = vmatpush.bf16.msra.mxu0 %v1065
        %1726 = vmatmul.bf16.gmra.mxu0 %v510
        %v1727 = vpop.f32.mrf.mxu0
        %v1728 = vadd.f32 %v1679, %v1727
        %v1729 = vpop.f32.mrf.mxu0
        %v1730 = vadd.f32 %v1681, %v1729
        %1731 = vmatmul.bf16.gmra.mxu0 %v512
        %v1732 = vpop.f32.mrf.mxu0
        %v1733 = vadd.f32 %v1684, %v1732
        %v1734 = vpop.f32.mrf.mxu0
        %v1735 = vadd.f32 %v1686, %v1734
        %1736 = vmatmul.bf16.gmra.mxu0 %v514
        %v1737 = vpop.f32.mrf.mxu0
        %v1738 = vadd.f32 %v1689, %v1737
        %v1739 = vpop.f32.mrf.mxu0
        %v1740 = vadd.f32 %v1691, %v1739
        %1741 = vmatmul.bf16.gmra.mxu0 %v516
        %v1742 = vpop.f32.mrf.mxu0
        %v1743 = vadd.f32 %v1694, %v1742
        %v1744 = vpop.f32.mrf.mxu0
        %v1745 = vadd.f32 %v1696, %v1744
        %1746 = vmatmul.bf16.gmra.mxu0 %v518
        %v1747 = vpop.f32.mrf.mxu0
        %v1748 = vadd.f32 %v1699, %v1747
        %v1749 = vpop.f32.mrf.mxu0
        %v1750 = vadd.f32 %v1701, %v1749
        %1751 = vmatmul.bf16.gmra.mxu0 %v520
        %v1752 = vpop.f32.mrf.mxu0
        %v1753 = vadd.f32 %v1704, %v1752
        %v1754 = vpop.f32.mrf.mxu0
        %v1755 = vadd.f32 %v1706, %v1754
        %1756 = vmatmul.bf16.gmra.mxu0 %v522
        %v1757 = vpop.f32.mrf.mxu0
        %v1758 = vadd.f32 %v1709, %v1757
        %v1759 = vpop.f32.mrf.mxu0
        %v1760 = vadd.f32 %v1711, %v1759
        %1761 = vmatmul.bf16.gmra.mxu0 %v524
        %v1762 = vpop.f32.mrf.mxu0
        %v1763 = vadd.f32 %v1714, %v1762
        %v1764 = vpop.f32.mrf.mxu0
        %v1765 = vadd.f32 %v1716, %v1764
        %1766 = vdwg.mxu0
        %1767 = vmatpush.bf16.msra.mxu0 %v1057
        %1768 = vmatpush.bf16.msra.mxu0 %v1048
        %1769 = vmatpush.bf16.msra.mxu0 %v1039
        %1770 = vmatpush.bf16.msra.mxu0 %v1030
        %1771 = vmatpush.bf16.msra.mxu0 %v1021
        %1772 = vmatpush.bf16.msra.mxu0 %v1012
        %1773 = vmatpush.bf16.msra.mxu0 %v1003
        %1774 = vmatpush.bf16.msra.mxu0 %v994
        %1775 = vmatmul.bf16.gmra.mxu0 %v509
        %v1776 = vpop.f32.mrf.mxu0
        %v1777 = vadd.f32 0.0, %v1776
        %v1778 = vpop.f32.mrf.mxu0
        %v1779 = vadd.f32 0.0, %v1778
        %1780 = vmatmul.bf16.gmra.mxu0 %v511
        %v1781 = vpop.f32.mrf.mxu0
        %v1782 = vadd.f32 0.0, %v1781
        %v1783 = vpop.f32.mrf.mxu0
        %v1784 = vadd.f32 0.0, %v1783
        %1785 = vmatmul.bf16.gmra.mxu0 %v513
        %v1786 = vpop.f32.mrf.mxu0
        %v1787 = vadd.f32 0.0, %v1786
        %v1788 = vpop.f32.mrf.mxu0
        %v1789 = vadd.f32 0.0, %v1788
        %1790 = vmatmul.bf16.gmra.mxu0 %v515
        %v1791 = vpop.f32.mrf.mxu0
        %v1792 = vadd.f32 0.0, %v1791
        %v1793 = vpop.f32.mrf.mxu0
        %v1794 = vadd.f32 0.0, %v1793
        %1795 = vmatmul.bf16.gmra.mxu0 %v517
        %v1796 = vpop.f32.mrf.mxu0
        %v1797 = vadd.f32 0.0, %v1796
        %v1798 = vpop.f32.mrf.mxu0
        %v1799 = vadd.f32 0.0, %v1798
        %1800 = vmatmul.bf16.gmra.mxu0 %v519
        %v1801 = vpop.f32.mrf.mxu0
        %v1802 = vadd.f32 0.0, %v1801
        %v1803 = vpop.f32.mrf.mxu0
        %v1804 = vadd.f32 0.0, %v1803
        %1805 = vmatmul.bf16.gmra.mxu0 %v521
        %v1806 = vpop.f32.mrf.mxu0
        %v1807 = vadd.f32 0.0, %v1806
        %v1808 = vpop.f32.mrf.mxu0
        %v1809 = vadd.f32 0.0, %v1808
        %1810 = vmatmul.bf16.gmra.mxu0 %v523
        %v1811 = vpop.f32.mrf.mxu0
        %v1812 = vadd.f32 0.0, %v1811
        %v1813 = vpop.f32.mrf.mxu0
        %v1814 = vadd.f32 0.0, %v1813
        %1815 = vdwg.mxu0
        %1816 = vmatpush.bf16.msra.mxu0 %v1129
        %1817 = vmatpush.bf16.msra.mxu0 %v1120
        %1818 = vmatpush.bf16.msra.mxu0 %v1111
        %1819 = vmatpush.bf16.msra.mxu0 %v1102
        %1820 = vmatpush.bf16.msra.mxu0 %v1093
        %1821 = vmatpush.bf16.msra.mxu0 %v1084
        %1822 = vmatpush.bf16.msra.mxu0 %v1075
        %1823 = vmatpush.bf16.msra.mxu0 %v1066
        %1824 = vmatmul.bf16.gmra.mxu0 %v510
        %v1825 = vpop.f32.mrf.mxu0
        %v1826 = vadd.f32 %v1777, %v1825
        %v1827 = vpop.f32.mrf.mxu0
        %v1828 = vadd.f32 %v1779, %v1827
        %1829 = vmatmul.bf16.gmra.mxu0 %v512
        %v1830 = vpop.f32.mrf.mxu0
        %v1831 = vadd.f32 %v1782, %v1830
        %v1832 = vpop.f32.mrf.mxu0
        %v1833 = vadd.f32 %v1784, %v1832
        %1834 = vmatmul.bf16.gmra.mxu0 %v514
        %v1835 = vpop.f32.mrf.mxu0
        %v1836 = vadd.f32 %v1787, %v1835
        %v1837 = vpop.f32.mrf.mxu0
        %v1838 = vadd.f32 %v1789, %v1837
        %1839 = vmatmul.bf16.gmra.mxu0 %v516
        %v1840 = vpop.f32.mrf.mxu0
        %v1841 = vadd.f32 %v1792, %v1840
        %v1842 = vpop.f32.mrf.mxu0
        %v1843 = vadd.f32 %v1794, %v1842
        %1844 = vmatmul.bf16.gmra.mxu0 %v518
        %v1845 = vpop.f32.mrf.mxu0
        %v1846 = vadd.f32 %v1797, %v1845
        %v1847 = vpop.f32.mrf.mxu0
        %v1848 = vadd.f32 %v1799, %v1847
        %1849 = vmatmul.bf16.gmra.mxu0 %v520
        %v1850 = vpop.f32.mrf.mxu0
        %v1851 = vadd.f32 %v1802, %v1850
        %v1852 = vpop.f32.mrf.mxu0
        %v1853 = vadd.f32 %v1804, %v1852
        %1854 = vmatmul.bf16.gmra.mxu0 %v522
        %v1855 = vpop.f32.mrf.mxu0
        %v1856 = vadd.f32 %v1807, %v1855
        %v1857 = vpop.f32.mrf.mxu0
        %v1858 = vadd.f32 %v1809, %v1857
        %1859 = vmatmul.bf16.gmra.mxu0 %v524
        %v1860 = vpop.f32.mrf.mxu0
        %v1861 = vadd.f32 %v1812, %v1860
        %v1862 = vpop.f32.mrf.mxu0
        %v1863 = vadd.f32 %v1814, %v1862
        %1864 = vdwg.mxu0
        %1865 = vmatpush.bf16.msra.mxu0 %v1058
        %1866 = vmatpush.bf16.msra.mxu0 %v1049
        %1867 = vmatpush.bf16.msra.mxu0 %v1040
        %1868 = vmatpush.bf16.msra.mxu0 %v1031
        %1869 = vmatpush.bf16.msra.mxu0 %v1022
        %1870 = vmatpush.bf16.msra.mxu0 %v1013
        %1871 = vmatpush.bf16.msra.mxu0 %v1004
        %1872 = vmatpush.bf16.msra.mxu0 %v995
        %1873 = vmatmul.bf16.gmra.mxu0 %v509
        %v1874 = vpop.f32.mrf.mxu0
        %v1875 = vadd.f32 0.0, %v1874
        %v1876 = vpop.f32.mrf.mxu0
        %v1877 = vadd.f32 0.0, %v1876
        %1878 = vmatmul.bf16.gmra.mxu0 %v511
        %v1879 = vpop.f32.mrf.mxu0
        %v1880 = vadd.f32 0.0, %v1879
        %v1881 = vpop.f32.mrf.mxu0
        %v1882 = vadd.f32 0.0, %v1881
        %1883 = vmatmul.bf16.gmra.mxu0 %v513
        %v1884 = vpop.f32.mrf.mxu0
        %v1885 = vadd.f32 0.0, %v1884
        %v1886 = vpop.f32.mrf.mxu0
        %v1887 = vadd.f32 0.0, %v1886
        %1888 = vmatmul.bf16.gmra.mxu0 %v515
        %v1889 = vpop.f32.mrf.mxu0
        %v1890 = vadd.f32 0.0, %v1889
        %v1891 = vpop.f32.mrf.mxu0
        %v1892 = vadd.f32 0.0, %v1891
        %1893 = vmatmul.bf16.gmra.mxu0 %v517
        %v1894 = vpop.f32.mrf.mxu0
        %v1895 = vadd.f32 0.0, %v1894
        %v1896 = vpop.f32.mrf.mxu0
        %v1897 = vadd.f32 0.0, %v1896
        %1898 = vmatmul.bf16.gmra.mxu0 %v519
        %v1899 = vpop.f32.mrf.mxu0
        %v1900 = vadd.f32 0.0, %v1899
        %v1901 = vpop.f32.mrf.mxu0
        %v1902 = vadd.f32 0.0, %v1901
        %1903 = vmatmul.bf16.gmra.mxu0 %v521
        %v1904 = vpop.f32.mrf.mxu0
        %v1905 = vadd.f32 0.0, %v1904
        %v1906 = vpop.f32.mrf.mxu0
        %v1907 = vadd.f32 0.0, %v1906
        %1908 = vmatmul.bf16.gmra.mxu0 %v523
        %v1909 = vpop.f32.mrf.mxu0
        %v1910 = vadd.f32 0.0, %v1909
        %v1911 = vpop.f32.mrf.mxu0
        %v1912 = vadd.f32 0.0, %v1911
        %1913 = vdwg.mxu0
        %1914 = vmatpush.bf16.msra.mxu0 %v1130
        %1915 = vmatpush.bf16.msra.mxu0 %v1121
        %1916 = vmatpush.bf16.msra.mxu0 %v1112
        %1917 = vmatpush.bf16.msra.mxu0 %v1103
        %1918 = vmatpush.bf16.msra.mxu0 %v1094
        %1919 = vmatpush.bf16.msra.mxu0 %v1085
        %1920 = vmatpush.bf16.msra.mxu0 %v1076
        %1921 = vmatpush.bf16.msra.mxu0 %v1067
        %1922 = vmatmul.bf16.gmra.mxu0 %v510
        %v1923 = vpop.f32.mrf.mxu0
        %v1924 = vadd.f32 %v1875, %v1923
        %v1925 = vpop.f32.mrf.mxu0
        %v1926 = vadd.f32 %v1877, %v1925
        %1927 = vmatmul.bf16.gmra.mxu0 %v512
        %v1928 = vpop.f32.mrf.mxu0
        %v1929 = vadd.f32 %v1880, %v1928
        %v1930 = vpop.f32.mrf.mxu0
        %v1931 = vadd.f32 %v1882, %v1930
        %1932 = vmatmul.bf16.gmra.mxu0 %v514
        %v1933 = vpop.f32.mrf.mxu0
        %v1934 = vadd.f32 %v1885, %v1933
        %v1935 = vpop.f32.mrf.mxu0
        %v1936 = vadd.f32 %v1887, %v1935
        %1937 = vmatmul.bf16.gmra.mxu0 %v516
        %v1938 = vpop.f32.mrf.mxu0
        %v1939 = vadd.f32 %v1890, %v1938
        %v1940 = vpop.f32.mrf.mxu0
        %v1941 = vadd.f32 %v1892, %v1940
        %1942 = vmatmul.bf16.gmra.mxu0 %v518
        %v1943 = vpop.f32.mrf.mxu0
        %v1944 = vadd.f32 %v1895, %v1943
        %v1945 = vpop.f32.mrf.mxu0
        %v1946 = vadd.f32 %v1897, %v1945
        %1947 = vmatmul.bf16.gmra.mxu0 %v520
        %v1948 = vpop.f32.mrf.mxu0
        %v1949 = vadd.f32 %v1900, %v1948
        %v1950 = vpop.f32.mrf.mxu0
        %v1951 = vadd.f32 %v1902, %v1950
        %1952 = vmatmul.bf16.gmra.mxu0 %v522
        %v1953 = vpop.f32.mrf.mxu0
        %v1954 = vadd.f32 %v1905, %v1953
        %v1955 = vpop.f32.mrf.mxu0
        %v1956 = vadd.f32 %v1907, %v1955
        %1957 = vmatmul.bf16.gmra.mxu0 %v524
        %v1958 = vpop.f32.mrf.mxu0
        %v1959 = vadd.f32 %v1910, %v1958
        %v1960 = vpop.f32.mrf.mxu0
        %v1961 = vadd.f32 %v1912, %v1960
        %1962 = vdwg.mxu0
        %1963 = vmatpush.bf16.msra.mxu0 %v1059
        %1964 = vmatpush.bf16.msra.mxu0 %v1050
        %1965 = vmatpush.bf16.msra.mxu0 %v1041
        %1966 = vmatpush.bf16.msra.mxu0 %v1032
        %1967 = vmatpush.bf16.msra.mxu0 %v1023
        %1968 = vmatpush.bf16.msra.mxu0 %v1014
        %1969 = vmatpush.bf16.msra.mxu0 %v1005
        %1970 = vmatpush.bf16.msra.mxu0 %v996
        %1971 = vmatmul.bf16.gmra.mxu0 %v509
        %v1972 = vpop.f32.mrf.mxu0
        %v1973 = vadd.f32 0.0, %v1972
        %v1974 = vpop.f32.mrf.mxu0
        %v1975 = vadd.f32 0.0, %v1974
        %1976 = vmatmul.bf16.gmra.mxu0 %v511
        %v1977 = vpop.f32.mrf.mxu0
        %v1978 = vadd.f32 0.0, %v1977
        %v1979 = vpop.f32.mrf.mxu0
        %v1980 = vadd.f32 0.0, %v1979
        %1981 = vmatmul.bf16.gmra.mxu0 %v513
        %v1982 = vpop.f32.mrf.mxu0
        %v1983 = vadd.f32 0.0, %v1982
        %v1984 = vpop.f32.mrf.mxu0
        %v1985 = vadd.f32 0.0, %v1984
        %1986 = vmatmul.bf16.gmra.mxu0 %v515
        %v1987 = vpop.f32.mrf.mxu0
        %v1988 = vadd.f32 0.0, %v1987
        %v1989 = vpop.f32.mrf.mxu0
        %v1990 = vadd.f32 0.0, %v1989
        %1991 = vmatmul.bf16.gmra.mxu0 %v517
        %v1992 = vpop.f32.mrf.mxu0
        %v1993 = vadd.f32 0.0, %v1992
        %v1994 = vpop.f32.mrf.mxu0
        %v1995 = vadd.f32 0.0, %v1994
        %1996 = vmatmul.bf16.gmra.mxu0 %v519
        %v1997 = vpop.f32.mrf.mxu0
        %v1998 = vadd.f32 0.0, %v1997
        %v1999 = vpop.f32.mrf.mxu0
        %v2000 = vadd.f32 0.0, %v1999
        %2001 = vmatmul.bf16.gmra.mxu0 %v521
        %v2002 = vpop.f32.mrf.mxu0
        %v2003 = vadd.f32 0.0, %v2002
        %v2004 = vpop.f32.mrf.mxu0
        %v2005 = vadd.f32 0.0, %v2004
        %2006 = vmatmul.bf16.gmra.mxu0 %v523
        %v2007 = vpop.f32.mrf.mxu0
        %v2008 = vadd.f32 0.0, %v2007
        %v2009 = vpop.f32.mrf.mxu0
        %v2010 = vadd.f32 0.0, %v2009
        %2011 = vdwg.mxu0
        %2012 = vmatpush.bf16.msra.mxu0 %v1131
        %2013 = vmatpush.bf16.msra.mxu0 %v1122
        %2014 = vmatpush.bf16.msra.mxu0 %v1113
        %2015 = vmatpush.bf16.msra.mxu0 %v1104
        %2016 = vmatpush.bf16.msra.mxu0 %v1095
        %2017 = vmatpush.bf16.msra.mxu0 %v1086
        %2018 = vmatpush.bf16.msra.mxu0 %v1077
        %2019 = vmatpush.bf16.msra.mxu0 %v1068
        %2020 = vmatmul.bf16.gmra.mxu0 %v510
        %v2021 = vpop.f32.mrf.mxu0
        %v2022 = vadd.f32 %v1973, %v2021
        %v2023 = vpop.f32.mrf.mxu0
        %v2024 = vadd.f32 %v1975, %v2023
        %2025 = vmatmul.bf16.gmra.mxu0 %v512
        %v2026 = vpop.f32.mrf.mxu0
        %v2027 = vadd.f32 %v1978, %v2026
        %v2028 = vpop.f32.mrf.mxu0
        %v2029 = vadd.f32 %v1980, %v2028
        %2030 = vmatmul.bf16.gmra.mxu0 %v514
        %v2031 = vpop.f32.mrf.mxu0
        %v2032 = vadd.f32 %v1983, %v2031
        %v2033 = vpop.f32.mrf.mxu0
        %v2034 = vadd.f32 %v1985, %v2033
        %2035 = vmatmul.bf16.gmra.mxu0 %v516
        %v2036 = vpop.f32.mrf.mxu0
        %v2037 = vadd.f32 %v1988, %v2036
        %v2038 = vpop.f32.mrf.mxu0
        %v2039 = vadd.f32 %v1990, %v2038
        %2040 = vmatmul.bf16.gmra.mxu0 %v518
        %v2041 = vpop.f32.mrf.mxu0
        %v2042 = vadd.f32 %v1993, %v2041
        %v2043 = vpop.f32.mrf.mxu0
        %v2044 = vadd.f32 %v1995, %v2043
        %2045 = vmatmul.bf16.gmra.mxu0 %v520
        %v2046 = vpop.f32.mrf.mxu0
        %v2047 = vadd.f32 %v1998, %v2046
        %v2048 = vpop.f32.mrf.mxu0
        %v2049 = vadd.f32 %v2000, %v2048
        %2050 = vmatmul.bf16.gmra.mxu0 %v522
        %v2051 = vpop.f32.mrf.mxu0
        %v2052 = vadd.f32 %v2003, %v2051
        %v2053 = vpop.f32.mrf.mxu0
        %v2054 = vadd.f32 %v2005, %v2053
        %2055 = vmatmul.bf16.gmra.mxu0 %v524
        %v2056 = vpop.f32.mrf.mxu0
        %v2057 = vadd.f32 %v2008, %v2056
        %v2058 = vpop.f32.mrf.mxu0
        %v2059 = vadd.f32 %v2010, %v2058
        %2060 = vdwg.mxu0
        %2061 = vmatpush.bf16.msra.mxu0 %v1060
        %2062 = vmatpush.bf16.msra.mxu0 %v1051
        %2063 = vmatpush.bf16.msra.mxu0 %v1042
        %2064 = vmatpush.bf16.msra.mxu0 %v1033
        %2065 = vmatpush.bf16.msra.mxu0 %v1024
        %2066 = vmatpush.bf16.msra.mxu0 %v1015
        %2067 = vmatpush.bf16.msra.mxu0 %v1006
        %2068 = vmatpush.bf16.msra.mxu0 %v997
        %2069 = vmatmul.bf16.gmra.mxu0 %v509
        %v2070 = vpop.f32.mrf.mxu0
        %v2071 = vadd.f32 0.0, %v2070
        %v2072 = vpop.f32.mrf.mxu0
        %v2073 = vadd.f32 0.0, %v2072
        %2074 = vmatmul.bf16.gmra.mxu0 %v511
        %v2075 = vpop.f32.mrf.mxu0
        %v2076 = vadd.f32 0.0, %v2075
        %v2077 = vpop.f32.mrf.mxu0
        %v2078 = vadd.f32 0.0, %v2077
        %2079 = vmatmul.bf16.gmra.mxu0 %v513
        %v2080 = vpop.f32.mrf.mxu0
        %v2081 = vadd.f32 0.0, %v2080
        %v2082 = vpop.f32.mrf.mxu0
        %v2083 = vadd.f32 0.0, %v2082
        %2084 = vmatmul.bf16.gmra.mxu0 %v515
        %v2085 = vpop.f32.mrf.mxu0
        %v2086 = vadd.f32 0.0, %v2085
        %v2087 = vpop.f32.mrf.mxu0
        %v2088 = vadd.f32 0.0, %v2087
        %2089 = vmatmul.bf16.gmra.mxu0 %v517
        %v2090 = vpop.f32.mrf.mxu0
        %v2091 = vadd.f32 0.0, %v2090
        %v2092 = vpop.f32.mrf.mxu0
        %v2093 = vadd.f32 0.0, %v2092
        %2094 = vmatmul.bf16.gmra.mxu0 %v519
        %v2095 = vpop.f32.mrf.mxu0
        %v2096 = vadd.f32 0.0, %v2095
        %v2097 = vpop.f32.mrf.mxu0
        %v2098 = vadd.f32 0.0, %v2097
        %2099 = vmatmul.bf16.gmra.mxu0 %v521
        %v2100 = vpop.f32.mrf.mxu0
        %v2101 = vadd.f32 0.0, %v2100
        %v2102 = vpop.f32.mrf.mxu0
        %v2103 = vadd.f32 0.0, %v2102
        %2104 = vmatmul.bf16.gmra.mxu0 %v523
        %v2105 = vpop.f32.mrf.mxu0
        %v2106 = vadd.f32 0.0, %v2105
        %v2107 = vpop.f32.mrf.mxu0
        %v2108 = vadd.f32 0.0, %v2107
        %2109 = vdwg.mxu0
        %2110 = vmatpush.bf16.msra.mxu0 %v1132
        %2111 = vmatpush.bf16.msra.mxu0 %v1123
        %2112 = vmatpush.bf16.msra.mxu0 %v1114
        %2113 = vmatpush.bf16.msra.mxu0 %v1105
        %2114 = vmatpush.bf16.msra.mxu0 %v1096
        %2115 = vmatpush.bf16.msra.mxu0 %v1087
        %2116 = vmatpush.bf16.msra.mxu0 %v1078
        %2117 = vmatpush.bf16.msra.mxu0 %v1069
        %2118 = vmatmul.bf16.gmra.mxu0 %v510
        %v2119 = vpop.f32.mrf.mxu0
        %v2120 = vadd.f32 %v2071, %v2119
        %v2121 = vpop.f32.mrf.mxu0
        %v2122 = vadd.f32 %v2073, %v2121
        %2123 = vmatmul.bf16.gmra.mxu0 %v512
        %v2124 = vpop.f32.mrf.mxu0
        %v2125 = vadd.f32 %v2076, %v2124
        %v2126 = vpop.f32.mrf.mxu0
        %v2127 = vadd.f32 %v2078, %v2126
        %2128 = vmatmul.bf16.gmra.mxu0 %v514
        %v2129 = vpop.f32.mrf.mxu0
        %v2130 = vadd.f32 %v2081, %v2129
        %v2131 = vpop.f32.mrf.mxu0
        %v2132 = vadd.f32 %v2083, %v2131
        %2133 = vmatmul.bf16.gmra.mxu0 %v516
        %v2134 = vpop.f32.mrf.mxu0
        %v2135 = vadd.f32 %v2086, %v2134
        %v2136 = vpop.f32.mrf.mxu0
        %v2137 = vadd.f32 %v2088, %v2136
        %2138 = vmatmul.bf16.gmra.mxu0 %v518
        %v2139 = vpop.f32.mrf.mxu0
        %v2140 = vadd.f32 %v2091, %v2139
        %v2141 = vpop.f32.mrf.mxu0
        %v2142 = vadd.f32 %v2093, %v2141
        %2143 = vmatmul.bf16.gmra.mxu0 %v520
        %v2144 = vpop.f32.mrf.mxu0
        %v2145 = vadd.f32 %v2096, %v2144
        %v2146 = vpop.f32.mrf.mxu0
        %v2147 = vadd.f32 %v2098, %v2146
        %2148 = vmatmul.bf16.gmra.mxu0 %v522
        %v2149 = vpop.f32.mrf.mxu0
        %v2150 = vadd.f32 %v2101, %v2149
        %v2151 = vpop.f32.mrf.mxu0
        %v2152 = vadd.f32 %v2103, %v2151
        %2153 = vmatmul.bf16.gmra.mxu0 %v524
        %v2154 = vpop.f32.mrf.mxu0
        %v2155 = vadd.f32 %v2106, %v2154
        %v2156 = vpop.f32.mrf.mxu0
        %v2157 = vadd.f32 %v2108, %v2156
        %2158 = vdwg.mxu0
        %v2159 = vrot.slane %v1434, 1
        %v2160 = vrot.slane %v1436, 1
        %v2161 = vrot.slane %v1439, 1
        %v2162 = vrot.slane %v1441, 1
        %v2163 = vrot.slane %v1444, 1
        %v2164 = vrot.slane %v1446, 1
        %v2165 = vrot.slane %v1449, 1
        %v2166 = vrot.slane %v1451, 1
        %v2167 = vrot.slane %v1454, 1
        %v2168 = vrot.slane %v1456, 1
        %v2169 = vrot.slane %v1459, 1
        %v2170 = vrot.slane %v1461, 1
        %v2171 = vrot.slane %v1464, 1
        %v2172 = vrot.slane %v1466, 1
        %v2173 = vrot.slane %v1469, 1
        %v2174 = vrot.slane %v1471, 1
        %v2175 = vlaneseq
        %v2176 = vshrl.u32 %v2175, 7
        %vm2177 = vcmp.lt.s32.totalorder %v2176, 7
        %v2178 = vsel %vm2177, %v2173, %v2174
        %v2179 = vsel %vm2177, %v2172, %v2173
        %v2180 = vsel %vm2177, %v2171, %v2172
        %v2181 = vsel %vm2177, %v2170, %v2171
        %v2182 = vsel %vm2177, %v2169, %v2170
        %v2183 = vsel %vm2177, %v2168, %v2169
        %v2184 = vsel %vm2177, %v2167, %v2168
        %v2185 = vsel %vm2177, %v2166, %v2167
        %v2186 = vsel %vm2177, %v2165, %v2166
        %v2187 = vsel %vm2177, %v2164, %v2165
        %v2188 = vsel %vm2177, %v2163, %v2164
        %v2189 = vsel %vm2177, %v2162, %v2163
        %v2190 = vsel %vm2177, %v2161, %v2162
        %v2191 = vsel %vm2177, %v2160, %v2161
        %v2192 = vsel %vm2177, %v2159, %v2160
        %v2193 = vsel %vm2177, %v2174, %v2159
        %v2194 = vadd.f32 %v1336, %v2192
        %v2195 = vadd.f32 %v1338, %v2191
        %v2196 = vadd.f32 %v1341, %v2190
        %v2197 = vadd.f32 %v1343, %v2189
        %v2198 = vadd.f32 %v1346, %v2188
        %v2199 = vadd.f32 %v1348, %v2187
        %v2200 = vadd.f32 %v1351, %v2186
        %v2201 = vadd.f32 %v1353, %v2185
        %v2202 = vadd.f32 %v1356, %v2184
        %v2203 = vadd.f32 %v1358, %v2183
        %v2204 = vadd.f32 %v1361, %v2182
        %v2205 = vadd.f32 %v1363, %v2181
        %v2206 = vadd.f32 %v1366, %v2180
        %v2207 = vadd.f32 %v1368, %v2179
        %v2208 = vadd.f32 %v1371, %v2178
        %v2209 = vadd.f32 %v1373, %v2193
        %v2210 = vrot.slane %v1532, 2
        %v2211 = vrot.slane %v1534, 2
        %v2212 = vrot.slane %v1537, 2
        %v2213 = vrot.slane %v1539, 2
        %v2214 = vrot.slane %v1542, 2
        %v2215 = vrot.slane %v1544, 2
        %v2216 = vrot.slane %v1547, 2
        %v2217 = vrot.slane %v1549, 2
        %v2218 = vrot.slane %v1552, 2
        %v2219 = vrot.slane %v1554, 2
        %v2220 = vrot.slane %v1557, 2
        %v2221 = vrot.slane %v1559, 2
        %v2222 = vrot.slane %v1562, 2
        %v2223 = vrot.slane %v1564, 2
        %v2224 = vrot.slane %v1567, 2
        %v2225 = vrot.slane %v1569, 2
        %vm2226 = vcmp.lt.s32.totalorder %v2176, 6
        %v2227 = vsel %vm2226, %v2224, %v2225
        %v2228 = vsel %vm2226, %v2223, %v2224
        %v2229 = vsel %vm2226, %v2222, %v2223
        %v2230 = vsel %vm2226, %v2221, %v2222
        %v2231 = vsel %vm2226, %v2220, %v2221
        %v2232 = vsel %vm2226, %v2219, %v2220
        %v2233 = vsel %vm2226, %v2218, %v2219
        %v2234 = vsel %vm2226, %v2217, %v2218
        %v2235 = vsel %vm2226, %v2216, %v2217
        %v2236 = vsel %vm2226, %v2215, %v2216
        %v2237 = vsel %vm2226, %v2214, %v2215
        %v2238 = vsel %vm2226, %v2213, %v2214
        %v2239 = vsel %vm2226, %v2212, %v2213
        %v2240 = vsel %vm2226, %v2211, %v2212
        %v2241 = vsel %vm2226, %v2210, %v2211
        %v2242 = vsel %vm2226, %v2225, %v2210
        %v2243 = vadd.f32 %v2194, %v2241
        %v2244 = vadd.f32 %v2195, %v2240
        %v2245 = vadd.f32 %v2196, %v2239
        %v2246 = vadd.f32 %v2197, %v2238
        %v2247 = vadd.f32 %v2198, %v2237
        %v2248 = vadd.f32 %v2199, %v2236
        %v2249 = vadd.f32 %v2200, %v2235
        %v2250 = vadd.f32 %v2201, %v2234
        %v2251 = vadd.f32 %v2202, %v2233
        %v2252 = vadd.f32 %v2203, %v2232
        %v2253 = vadd.f32 %v2204, %v2231
        %v2254 = vadd.f32 %v2205, %v2230
        %v2255 = vadd.f32 %v2206, %v2229
        %v2256 = vadd.f32 %v2207, %v2228
        %v2257 = vadd.f32 %v2208, %v2227
        %v2258 = vadd.f32 %v2209, %v2242
        %v2259 = vrot.slane %v1630, 7
        %v2260 = vrot.slane %v1632, 7
        %v2261 = vrot.slane %v1635, 7
        %v2262 = vrot.slane %v1637, 7
        %v2263 = vrot.slane %v1640, 7
        %v2264 = vrot.slane %v1642, 7
        %v2265 = vrot.slane %v1645, 7
        %v2266 = vrot.slane %v1647, 7
        %v2267 = vrot.slane %v1650, 7
        %v2268 = vrot.slane %v1652, 7
        %v2269 = vrot.slane %v1655, 7
        %v2270 = vrot.slane %v1657, 7
        %v2271 = vrot.slane %v1660, 7
        %v2272 = vrot.slane %v1662, 7
        %v2273 = vrot.slane %v1665, 7
        %v2274 = vrot.slane %v1667, 7
        %vm2275 = vcmp.lt.s32.totalorder %v2176, 1
        %v2276 = vsel %vm2275, %v2273, %v2274
        %v2277 = vsel %vm2275, %v2272, %v2273
        %v2278 = vsel %vm2275, %v2271, %v2272
        %v2279 = vsel %vm2275, %v2270, %v2271
        %v2280 = vsel %vm2275, %v2269, %v2270
        %v2281 = vsel %vm2275, %v2268, %v2269
        %v2282 = vsel %vm2275, %v2267, %v2268
        %v2283 = vsel %vm2275, %v2266, %v2267
        %v2284 = vsel %vm2275, %v2265, %v2266
        %v2285 = vsel %vm2275, %v2264, %v2265
        %v2286 = vsel %vm2275, %v2263, %v2264
        %v2287 = vsel %vm2275, %v2262, %v2263
        %v2288 = vsel %vm2275, %v2261, %v2262
        %v2289 = vsel %vm2275, %v2260, %v2261
        %v2290 = vsel %vm2275, %v2259, %v2260
        %v2291 = vsel %vm2275, %v2274, %v2259
        %v2292 = vadd.f32 %v2243, %v2290
        %v2293 = vadd.f32 %v2244, %v2289
        %v2294 = vadd.f32 %v2245, %v2288
        %v2295 = vadd.f32 %v2246, %v2287
        %v2296 = vadd.f32 %v2247, %v2286
        %v2297 = vadd.f32 %v2248, %v2285
        %v2298 = vadd.f32 %v2249, %v2284
        %v2299 = vadd.f32 %v2250, %v2283
        %v2300 = vadd.f32 %v2251, %v2282
        %v2301 = vadd.f32 %v2252, %v2281
        %v2302 = vadd.f32 %v2253, %v2280
        %v2303 = vadd.f32 %v2254, %v2279
        %v2304 = vadd.f32 %v2255, %v2278
        %v2305 = vadd.f32 %v2256, %v2277
        %v2306 = vadd.f32 %v2257, %v2276
        %v2307 = vadd.f32 %v2258, %v2291
        %v2308 = vadd.f32 %v2292, %v1730
        %v2309 = vadd.f32 %v2293, %v1733
        %v2310 = vadd.f32 %v2294, %v1735
        %v2311 = vadd.f32 %v2295, %v1738
        %v2312 = vadd.f32 %v2296, %v1740
        %v2313 = vadd.f32 %v2297, %v1743
        %v2314 = vadd.f32 %v2298, %v1745
        %v2315 = vadd.f32 %v2299, %v1748
        %v2316 = vadd.f32 %v2300, %v1750
        %v2317 = vadd.f32 %v2301, %v1753
        %v2318 = vadd.f32 %v2302, %v1755
        %v2319 = vadd.f32 %v2303, %v1758
        %v2320 = vadd.f32 %v2304, %v1760
        %v2321 = vadd.f32 %v2305, %v1763
        %v2322 = vadd.f32 %v2306, %v1765
        %v2323 = vadd.f32 %v2307, %v1728
        %v2324 = vrot.slane %v1826, 1
        %v2325 = vrot.slane %v1828, 1
        %v2326 = vrot.slane %v1831, 1
        %v2327 = vrot.slane %v1833, 1
        %v2328 = vrot.slane %v1836, 1
        %v2329 = vrot.slane %v1838, 1
        %v2330 = vrot.slane %v1841, 1
        %v2331 = vrot.slane %v1843, 1
        %v2332 = vrot.slane %v1846, 1
        %v2333 = vrot.slane %v1848, 1
        %v2334 = vrot.slane %v1851, 1
        %v2335 = vrot.slane %v1853, 1
        %v2336 = vrot.slane %v1856, 1
        %v2337 = vrot.slane %v1858, 1
        %v2338 = vrot.slane %v1861, 1
        %v2339 = vrot.slane %v1863, 1
        %v2340 = vsel %vm2177, %v2338, %v2339
        %v2341 = vsel %vm2177, %v2337, %v2338
        %v2342 = vsel %vm2177, %v2336, %v2337
        %v2343 = vsel %vm2177, %v2335, %v2336
        %v2344 = vsel %vm2177, %v2334, %v2335
        %v2345 = vsel %vm2177, %v2333, %v2334
        %v2346 = vsel %vm2177, %v2332, %v2333
        %v2347 = vsel %vm2177, %v2331, %v2332
        %v2348 = vsel %vm2177, %v2330, %v2331
        %v2349 = vsel %vm2177, %v2329, %v2330
        %v2350 = vsel %vm2177, %v2328, %v2329
        %v2351 = vsel %vm2177, %v2327, %v2328
        %v2352 = vsel %vm2177, %v2326, %v2327
        %v2353 = vsel %vm2177, %v2325, %v2326
        %v2354 = vsel %vm2177, %v2324, %v2325
        %v2355 = vsel %vm2177, %v2339, %v2324
        %v2356 = vadd.f32 %v2308, %v2353
        %v2357 = vadd.f32 %v2309, %v2352
        %v2358 = vadd.f32 %v2310, %v2351
        %v2359 = vadd.f32 %v2311, %v2350
        %v2360 = vadd.f32 %v2312, %v2349
        %v2361 = vadd.f32 %v2313, %v2348
        %v2362 = vadd.f32 %v2314, %v2347
        %v2363 = vadd.f32 %v2315, %v2346
        %v2364 = vadd.f32 %v2316, %v2345
        %v2365 = vadd.f32 %v2317, %v2344
        %v2366 = vadd.f32 %v2318, %v2343
        %v2367 = vadd.f32 %v2319, %v2342
        %v2368 = vadd.f32 %v2320, %v2341
        %v2369 = vadd.f32 %v2321, %v2340
        %v2370 = vadd.f32 %v2322, %v2355
        %v2371 = vadd.f32 %v2323, %v2354
        %v2372 = vrot.slane %v1924, 6
        %v2373 = vrot.slane %v1926, 6
        %v2374 = vrot.slane %v1929, 6
        %v2375 = vrot.slane %v1931, 6
        %v2376 = vrot.slane %v1934, 6
        %v2377 = vrot.slane %v1936, 6
        %v2378 = vrot.slane %v1939, 6
        %v2379 = vrot.slane %v1941, 6
        %v2380 = vrot.slane %v1944, 6
        %v2381 = vrot.slane %v1946, 6
        %v2382 = vrot.slane %v1949, 6
        %v2383 = vrot.slane %v1951, 6
        %v2384 = vrot.slane %v1954, 6
        %v2385 = vrot.slane %v1956, 6
        %v2386 = vrot.slane %v1959, 6
        %v2387 = vrot.slane %v1961, 6
        %vm2388 = vcmp.lt.s32.totalorder %v2176, 2
        %v2389 = vsel %vm2388, %v2386, %v2387
        %v2390 = vsel %vm2388, %v2385, %v2386
        %v2391 = vsel %vm2388, %v2384, %v2385
        %v2392 = vsel %vm2388, %v2383, %v2384
        %v2393 = vsel %vm2388, %v2382, %v2383
        %v2394 = vsel %vm2388, %v2381, %v2382
        %v2395 = vsel %vm2388, %v2380, %v2381
        %v2396 = vsel %vm2388, %v2379, %v2380
        %v2397 = vsel %vm2388, %v2378, %v2379
        %v2398 = vsel %vm2388, %v2377, %v2378
        %v2399 = vsel %vm2388, %v2376, %v2377
        %v2400 = vsel %vm2388, %v2375, %v2376
        %v2401 = vsel %vm2388, %v2374, %v2375
        %v2402 = vsel %vm2388, %v2373, %v2374
        %v2403 = vsel %vm2388, %v2372, %v2373
        %v2404 = vsel %vm2388, %v2387, %v2372
        %v2405 = vadd.f32 %v2356, %v2402
        %v2406 = vadd.f32 %v2357, %v2401
        %v2407 = vadd.f32 %v2358, %v2400
        %v2408 = vadd.f32 %v2359, %v2399
        %v2409 = vadd.f32 %v2360, %v2398
        %v2410 = vadd.f32 %v2361, %v2397
        %v2411 = vadd.f32 %v2362, %v2396
        %v2412 = vadd.f32 %v2363, %v2395
        %v2413 = vadd.f32 %v2364, %v2394
        %v2414 = vadd.f32 %v2365, %v2393
        %v2415 = vadd.f32 %v2366, %v2392
        %v2416 = vadd.f32 %v2367, %v2391
        %v2417 = vadd.f32 %v2368, %v2390
        %v2418 = vadd.f32 %v2369, %v2389
        %v2419 = vadd.f32 %v2370, %v2404
        %v2420 = vadd.f32 %v2371, %v2403
        %v2421 = vrot.slane %v2022, 7
        %v2422 = vrot.slane %v2024, 7
        %v2423 = vrot.slane %v2027, 7
        %v2424 = vrot.slane %v2029, 7
        %v2425 = vrot.slane %v2032, 7
        %v2426 = vrot.slane %v2034, 7
        %v2427 = vrot.slane %v2037, 7
        %v2428 = vrot.slane %v2039, 7
        %v2429 = vrot.slane %v2042, 7
        %v2430 = vrot.slane %v2044, 7
        %v2431 = vrot.slane %v2047, 7
        %v2432 = vrot.slane %v2049, 7
        %v2433 = vrot.slane %v2052, 7
        %v2434 = vrot.slane %v2054, 7
        %v2435 = vrot.slane %v2057, 7
        %v2436 = vrot.slane %v2059, 7
        %v2437 = vsel %vm2275, %v2435, %v2436
        %v2438 = vsel %vm2275, %v2434, %v2435
        %v2439 = vsel %vm2275, %v2433, %v2434
        %v2440 = vsel %vm2275, %v2432, %v2433
        %v2441 = vsel %vm2275, %v2431, %v2432
        %v2442 = vsel %vm2275, %v2430, %v2431
        %v2443 = vsel %vm2275, %v2429, %v2430
        %v2444 = vsel %vm2275, %v2428, %v2429
        %v2445 = vsel %vm2275, %v2427, %v2428
        %v2446 = vsel %vm2275, %v2426, %v2427
        %v2447 = vsel %vm2275, %v2425, %v2426
        %v2448 = vsel %vm2275, %v2424, %v2425
        %v2449 = vsel %vm2275, %v2423, %v2424
        %v2450 = vsel %vm2275, %v2422, %v2423
        %v2451 = vsel %vm2275, %v2421, %v2422
        %v2452 = vsel %vm2275, %v2436, %v2421
        %v2453 = vadd.f32 %v2405, %v2450
        %v2454 = vadd.f32 %v2406, %v2449
        %v2455 = vadd.f32 %v2407, %v2448
        %v2456 = vadd.f32 %v2408, %v2447
        %v2457 = vadd.f32 %v2409, %v2446
        %v2458 = vadd.f32 %v2410, %v2445
        %v2459 = vadd.f32 %v2411, %v2444
        %v2460 = vadd.f32 %v2412, %v2443
        %v2461 = vadd.f32 %v2413, %v2442
        %v2462 = vadd.f32 %v2414, %v2441
        %v2463 = vadd.f32 %v2415, %v2440
        %v2464 = vadd.f32 %v2416, %v2439
        %v2465 = vadd.f32 %v2417, %v2438
        %v2466 = vadd.f32 %v2418, %v2437
        %v2467 = vadd.f32 %v2419, %v2452
        %v2468 = vadd.f32 %v2420, %v2451
        %v2469 = vadd.f32 %v2453, %v2125
        %v2470 = vadd.f32 %v2454, %v2127
        %v2471 = vadd.f32 %v2455, %v2130
        %v2472 = vadd.f32 %v2456, %v2132
        %v2473 = vadd.f32 %v2457, %v2135
        %v2474 = vadd.f32 %v2458, %v2137
        %v2475 = vadd.f32 %v2459, %v2140
        %v2476 = vadd.f32 %v2460, %v2142
        %v2477 = vadd.f32 %v2461, %v2145
        %v2478 = vadd.f32 %v2462, %v2147
        %v2479 = vadd.f32 %v2463, %v2150
        %v2480 = vadd.f32 %v2464, %v2152
        %v2481 = vadd.f32 %v2465, %v2155
        %v2482 = vadd.f32 %v2466, %v2157
        %v2483 = vadd.f32 %v2467, %v2120
        %v2484 = vadd.f32 %v2468, %v2122
        %v2485 = vld [vmem:[#allocation2] sm:$0xff]
        %v2486 = vld [vmem:[#allocation2 + $0x8] sm:$0xff]
        %v2487 = vld [vmem:[#allocation2 + $0x10] sm:$0xff]
        %v2488 = vld [vmem:[#allocation2 + $0x18] sm:$0xff]
        %v2489 = vld [vmem:[#allocation2 + $0x20] sm:$0xff]
        %v2490 = vld [vmem:[#allocation2 + $0x28] sm:$0xff]
        %v2491 = vld [vmem:[#allocation2 + $0x30] sm:$0xff]
        %v2492 = vld [vmem:[#allocation2 + $0x38] sm:$0xff]
        %v2493 = vld [vmem:[#allocation2 + $0x40] sm:$0xff]
        %v2494 = vld [vmem:[#allocation2 + $0x48] sm:$0xff]
        %v2495 = vld [vmem:[#allocation2 + $0x50] sm:$0xff]
        %v2496 = vld [vmem:[#allocation2 + $0x58] sm:$0xff]
        %v2497 = vld [vmem:[#allocation2 + $0x60] sm:$0xff]
        %v2498 = vld [vmem:[#allocation2 + $0x68] sm:$0xff]
        %v2499 = vld [vmem:[#allocation2 + $0x70] sm:$0xff]
        %v2500 = vld [vmem:[#allocation2 + $0x78] sm:$0xff]
        %v2501 = vadd.f32 %v2485, %v2469
        %v2502 = vadd.f32 %v2486, %v2470
        %v2503 = vadd.f32 %v2487, %v2471
        %v2504 = vadd.f32 %v2488, %v2472
        %v2505 = vadd.f32 %v2489, %v2473
        %v2506 = vadd.f32 %v2490, %v2474
        %v2507 = vadd.f32 %v2491, %v2475
        %v2508 = vadd.f32 %v2492, %v2476
        %v2509 = vadd.f32 %v2493, %v2477
        %v2510 = vadd.f32 %v2494, %v2478
        %v2511 = vadd.f32 %v2495, %v2479
        %v2512 = vadd.f32 %v2496, %v2480
        %v2513 = vadd.f32 %v2497, %v2481
        %v2514 = vadd.f32 %v2498, %v2482
        %v2515 = vadd.f32 %v2499, %v2483
        %v2516 = vadd.f32 %v2500, %v2484
        %2517 = vst [vmem:[#allocation2] sm:$0xff] %v2501
        %2518 = vst [vmem:[#allocation2 + $0x8] sm:$0xff] %v2502
        %2519 = vst [vmem:[#allocation2 + $0x10] sm:$0xff] %v2503
        %2520 = vst [vmem:[#allocation2 + $0x18] sm:$0xff] %v2504
        %2521 = vst [vmem:[#allocation2 + $0x20] sm:$0xff] %v2505
        %2522 = vst [vmem:[#allocation2 + $0x28] sm:$0xff] %v2506
        %2523 = vst [vmem:[#allocation2 + $0x30] sm:$0xff] %v2507
        %2524 = vst [vmem:[#allocation2 + $0x38] sm:$0xff] %v2508
        %2525 = vst [vmem:[#allocation2 + $0x40] sm:$0xff] %v2509
        %2526 = vst [vmem:[#allocation2 + $0x48] sm:$0xff] %v2510
        %2527 = vst [vmem:[#allocation2 + $0x50] sm:$0xff] %v2511
        %2528 = vst [vmem:[#allocation2 + $0x58] sm:$0xff] %v2512
        %2529 = vst [vmem:[#allocation2 + $0x60] sm:$0xff] %v2513
        %2530 = vst [vmem:[#allocation2 + $0x68] sm:$0xff] %v2514
        %2531 = vst [vmem:[#allocation2 + $0x70] sm:$0xff] %v2515
        %2532 = vst [vmem:[#allocation2 + $0x78] sm:$0xff] %v2516
        %p2533 = scmp.eq.s32.totalorder %s22, 1
        // Predicated region
        $region53: #{tpu_custom_call.1} parent=35 // pred_check
          %p2534 = pneg %p2533
        $region54: #{tpu_custom_call.1} parent=35 // pred_check_branch
          %2536 = sbr.rel (%p2534) target = $region56
        $region55: #{tpu_custom_call.1} parent=35 // pred_region
          %v2537 = vld [vmem:[#allocation2] sm:$0xff]
          %v2538 = vld [vmem:[#allocation2 + $0x8] sm:$0xff]
          %v2539 = vld [vmem:[#allocation2 + $0x10] sm:$0xff]
          %v2540 = vld [vmem:[#allocation2 + $0x18] sm:$0xff]
          %v2541 = vld [vmem:[#allocation2 + $0x20] sm:$0xff]
          %v2542 = vld [vmem:[#allocation2 + $0x28] sm:$0xff]
          %v2543 = vld [vmem:[#allocation2 + $0x30] sm:$0xff]
          %v2544 = vld [vmem:[#allocation2 + $0x38] sm:$0xff]
          %v2545 = vld [vmem:[#allocation2 + $0x40] sm:$0xff]
          %v2546 = vld [vmem:[#allocation2 + $0x48] sm:$0xff]
          %v2547 = vld [vmem:[#allocation2 + $0x50] sm:$0xff]
          %v2548 = vld [vmem:[#allocation2 + $0x58] sm:$0xff]
          %v2549 = vld [vmem:[#allocation2 + $0x60] sm:$0xff]
          %v2550 = vld [vmem:[#allocation2 + $0x68] sm:$0xff]
          %v2551 = vld [vmem:[#allocation2 + $0x70] sm:$0xff]
          %v2552 = vld [vmem:[#allocation2 + $0x78] sm:$0xff]
          %v2553 = vld [vmem:[%s2] sm:$0xff]
          %v2554 = vld [vmem:[%s2 + $0x8] sm:$0xff]
          %v2555 = vld [vmem:[%s2 + $0x10] sm:$0xff]
          %v2556 = vld [vmem:[%s2 + $0x18] sm:$0xff]
          %v2557 = vld [vmem:[%s2 + $0x20] sm:$0xff]
          %v2558 = vld [vmem:[%s2 + $0x28] sm:$0xff]
          %v2559 = vld [vmem:[%s2 + $0x30] sm:$0xff]
          %v2560 = vld [vmem:[%s2 + $0x38] sm:$0xff]
          %v2561 = vld [vmem:[%s2 + $0x40] sm:$0xff]
          %v2562 = vld [vmem:[%s2 + $0x48] sm:$0xff]
          %v2563 = vld [vmem:[%s2 + $0x50] sm:$0xff]
          %v2564 = vld [vmem:[%s2 + $0x58] sm:$0xff]
          %v2565 = vld [vmem:[%s2 + $0x60] sm:$0xff]
          %v2566 = vld [vmem:[%s2 + $0x68] sm:$0xff]
          %v2567 = vld [vmem:[%s2 + $0x70] sm:$0xff]
          %v2568 = vld [vmem:[%s2 + $0x78] sm:$0xff]
          %2570 = vset.pattern.permute.xlu0 0
          %2571 = vperm.xlu0 %2570, %v2553
          %v2572 = vpop.permute.xlu0 %2571
          %2575 = vset.pattern.permute.xlu0 0
          %2576 = vperm.xlu0 %2575, %v2554
          %v2577 = vpop.permute.xlu0 %2576
          %2580 = vset.pattern.permute.xlu0 0
          %2581 = vperm.xlu0 %2580, %v2555
          %v2582 = vpop.permute.xlu0 %2581
          %2585 = vset.pattern.permute.xlu0 0
          %2586 = vperm.xlu0 %2585, %v2556
          %v2587 = vpop.permute.xlu0 %2586
          %2590 = vset.pattern.permute.xlu0 0
          %2591 = vperm.xlu0 %2590, %v2557
          %v2592 = vpop.permute.xlu0 %2591
          %2595 = vset.pattern.permute.xlu0 0
          %2596 = vperm.xlu0 %2595, %v2558
          %v2597 = vpop.permute.xlu0 %2596
          %2600 = vset.pattern.permute.xlu0 0
          %2601 = vperm.xlu0 %2600, %v2559
          %v2602 = vpop.permute.xlu0 %2601
          %2605 = vset.pattern.permute.xlu0 0
          %2606 = vperm.xlu0 %2605, %v2560
          %v2607 = vpop.permute.xlu0 %2606
          %2610 = vset.pattern.permute.xlu0 0
          %2611 = vperm.xlu0 %2610, %v2561
          %v2612 = vpop.permute.xlu0 %2611
          %2615 = vset.pattern.permute.xlu0 0
          %2616 = vperm.xlu0 %2615, %v2562
          %v2617 = vpop.permute.xlu0 %2616
          %2620 = vset.pattern.permute.xlu0 0
          %2621 = vperm.xlu0 %2620, %v2563
          %v2622 = vpop.permute.xlu0 %2621
          %2625 = vset.pattern.permute.xlu0 0
          %2626 = vperm.xlu0 %2625, %v2564
          %v2627 = vpop.permute.xlu0 %2626
          %2630 = vset.pattern.permute.xlu0 0
          %2631 = vperm.xlu0 %2630, %v2565
          %v2632 = vpop.permute.xlu0 %2631
          %2635 = vset.pattern.permute.xlu0 0
          %2636 = vperm.xlu0 %2635, %v2566
          %v2637 = vpop.permute.xlu0 %2636
          %2640 = vset.pattern.permute.xlu0 0
          %2641 = vperm.xlu0 %2640, %v2567
          %v2642 = vpop.permute.xlu0 %2641
          %2645 = vset.pattern.permute.xlu0 0
          %2646 = vperm.xlu0 %2645, %v2568
          %v2647 = vpop.permute.xlu0 %2646
          %v2649 = vmul.f32 %v2537, %v2572
          %v2650 = vmul.f32 %v2538, %v2577
          %v2651 = vmul.f32 %v2539, %v2582
          %v2652 = vmul.f32 %v2540, %v2587
          %v2653 = vmul.f32 %v2541, %v2592
          %v2654 = vmul.f32 %v2542, %v2597
          %v2655 = vmul.f32 %v2543, %v2602
          %v2656 = vmul.f32 %v2544, %v2607
          %v2657 = vmul.f32 %v2545, %v2612
          %v2658 = vmul.f32 %v2546, %v2617
          %v2659 = vmul.f32 %v2547, %v2622
          %v2660 = vmul.f32 %v2548, %v2627
          %v2661 = vmul.f32 %v2549, %v2632
          %v2662 = vmul.f32 %v2550, %v2637
          %v2663 = vmul.f32 %v2551, %v2642
          %v2664 = vmul.f32 %v2552, %v2647
          %v2665 = vadd.f32 %v2649, %v2650
          %v2666 = vadd.f32 %v2665, %v2651
          %v2667 = vadd.f32 %v2666, %v2652
          %v2668 = vadd.f32 %v2667, %v2653
          %v2669 = vadd.f32 %v2668, %v2654
          %v2670 = vadd.f32 %v2669, %v2655
          %v2671 = vadd.f32 %v2670, %v2656
          %v2672 = vadd.f32 %v2671, %v2657
          %v2673 = vadd.f32 %v2672, %v2658
          %v2674 = vadd.f32 %v2673, %v2659
          %v2675 = vadd.f32 %v2674, %v2660
          %v2676 = vadd.f32 %v2675, %v2661
          %v2677 = vadd.f32 %v2676, %v2662
          %v2678 = vadd.f32 %v2677, %v2663
          %v2679 = vadd.f32 %v2678, %v2664
          %v2680 = vrot.slane %v2679, 4
          %v2681 = vadd.f32 %v2679, %v2680
          %v2682 = vrot.slane %v2681, 2
          %v2683 = vadd.f32 %v2681, %v2682
          %v2684 = vrot.slane %v2683, 1
          %v2685 = vadd.f32 %v2683, %v2684
          %v2686 = vmul.f32 %v2649, %v2537
          %v2687 = vmul.f32 %v2650, %v2538
          %v2688 = vmul.f32 %v2651, %v2539
          %v2689 = vmul.f32 %v2652, %v2540
          %v2690 = vmul.f32 %v2653, %v2541
          %v2691 = vmul.f32 %v2654, %v2542
          %v2692 = vmul.f32 %v2655, %v2543
          %v2693 = vmul.f32 %v2656, %v2544
          %v2694 = vmul.f32 %v2657, %v2545
          %v2695 = vmul.f32 %v2658, %v2546
          %v2696 = vmul.f32 %v2659, %v2547
          %v2697 = vmul.f32 %v2660, %v2548
          %v2698 = vmul.f32 %v2661, %v2549
          %v2699 = vmul.f32 %v2662, %v2550
          %v2700 = vmul.f32 %v2663, %v2551
          %v2701 = vmul.f32 %v2664, %v2552
          %v2702 = vadd.f32 %v2686, %v2687
          %v2703 = vadd.f32 %v2702, %v2688
          %v2704 = vadd.f32 %v2703, %v2689
          %v2705 = vadd.f32 %v2704, %v2690
          %v2706 = vadd.f32 %v2705, %v2691
          %v2707 = vadd.f32 %v2706, %v2692
          %v2708 = vadd.f32 %v2707, %v2693
          %v2709 = vadd.f32 %v2708, %v2694
          %v2710 = vadd.f32 %v2709, %v2695
          %v2711 = vadd.f32 %v2710, %v2696
          %v2712 = vadd.f32 %v2711, %v2697
          %v2713 = vadd.f32 %v2712, %v2698
          %v2714 = vadd.f32 %v2713, %v2699
          %v2715 = vadd.f32 %v2714, %v2700
          %v2716 = vadd.f32 %v2715, %v2701
          %v2717 = vrot.slane %v2716, 4
          %v2718 = vadd.f32 %v2716, %v2717
          %v2719 = vrot.slane %v2718, 2
          %v2720 = vadd.f32 %v2718, %v2719
          %v2721 = vrot.slane %v2720, 1
          %v2722 = vadd.f32 %v2720, %v2721
          %v2723 = vrcp.pop 50.0
          %v2724 = vmul.f32 50.0, %v2723
          %v2725 = vsub.f32 1.0, %v2724
          %v2726 = vmul.f32 %v2723, %v2725
          %v2727 = vadd.f32 %v2723, %v2726
          %vm2728 = vweird.f32 %v2723
          %v2729 = vsel %vm2728, %v2723, %v2727
          %v2730 = vmul.f32 %v2685, %v2729
          %v2731 = vmul.f32 %v2722, %v2729
          %v2732 = vmul.f32 %v2730, %v2730
          %v2733 = vsub.f32 %v2731, %v2732
          %v2734 = vadd.f32 %v2733, 1e-05
          %v2735 = vrsqrt.pop %v2734
          %v2736 = vmul.f32 %v2735, %v2734
          %v2737 = vmul.f32 %v2736, %v2735
          %v2738 = vmul.f32 0.5, %v2737
          %v2739 = vsub.f32 1.5, %v2738
          %v2740 = vmul.f32 %v2735, %v2739
          %vm2741 = vweird.f32 %v2734
          %vm2742 = vweird.f32 %v2735
          %vm2743 = vmor %vm2741, %vm2742
          %v2744 = vsel %vm2743, %v2735, %v2740
          %v2745 = vld [vmem:[#allocation8] sm:$0x1]
          %v2746 = vld [vmem:[#allocation8 + $0x1] sm:$0x1]
          %v2747 = vmul.f32 %v2745, %v2744
          %v2748 = vmul.f32 %v2730, %v2747
          %v2749 = vsub.f32 %v2746, %v2748
          %v2750 = vperm.slane %v2747, 0
          %v2751 = vmul.f32 %v2537, %v2750
          %v2752 = vmul.f32 %v2538, %v2750
          %v2753 = vmul.f32 %v2539, %v2750
          %v2754 = vmul.f32 %v2540, %v2750
          %v2755 = vmul.f32 %v2541, %v2750
          %v2756 = vmul.f32 %v2542, %v2750
          %v2757 = vmul.f32 %v2543, %v2750
          %v2758 = vmul.f32 %v2544, %v2750
          %v2759 = vmul.f32 %v2545, %v2750
          %v2760 = vmul.f32 %v2546, %v2750
          %v2761 = vmul.f32 %v2547, %v2750
          %v2762 = vmul.f32 %v2548, %v2750
          %v2763 = vmul.f32 %v2549, %v2750
          %v2764 = vmul.f32 %v2550, %v2750
          %v2765 = vmul.f32 %v2551, %v2750
          %v2766 = vmul.f32 %v2552, %v2750
          %v2767 = vperm.slane %v2749, 0
          %v2768 = vadd.f32 %v2751, %v2767
          %v2769 = vadd.f32 %v2752, %v2767
          %v2770 = vadd.f32 %v2753, %v2767
          %v2771 = vadd.f32 %v2754, %v2767
          %v2772 = vadd.f32 %v2755, %v2767
          %v2773 = vadd.f32 %v2756, %v2767
          %v2774 = vadd.f32 %v2757, %v2767
          %v2775 = vadd.f32 %v2758, %v2767
          %v2776 = vadd.f32 %v2759, %v2767
          %v2777 = vadd.f32 %v2760, %v2767
          %v2778 = vadd.f32 %v2761, %v2767
          %v2779 = vadd.f32 %v2762, %v2767
          %v2780 = vadd.f32 %v2763, %v2767
          %v2781 = vadd.f32 %v2764, %v2767
          %v2782 = vadd.f32 %v2765, %v2767
          %v2783 = vadd.f32 %v2766, %v2767
          %2784 = vst [vmem:[#allocation9] sm:$0xff] %v2768
          %2785 = vst [vmem:[#allocation9 + $0x8] sm:$0xff] %v2769
          %2786 = vst [vmem:[#allocation9 + $0x10] sm:$0xff] %v2770
          %2787 = vst [vmem:[#allocation9 + $0x18] sm:$0xff] %v2771
          %2788 = vst [vmem:[#allocation9 + $0x20] sm:$0xff] %v2772
          %2789 = vst [vmem:[#allocation9 + $0x28] sm:$0xff] %v2773
          %2790 = vst [vmem:[#allocation9 + $0x30] sm:$0xff] %v2774
          %2791 = vst [vmem:[#allocation9 + $0x38] sm:$0xff] %v2775
          %2792 = vst [vmem:[#allocation9 + $0x40] sm:$0xff] %v2776
          %2793 = vst [vmem:[#allocation9 + $0x48] sm:$0xff] %v2777
          %2794 = vst [vmem:[#allocation9 + $0x50] sm:$0xff] %v2778
          %2795 = vst [vmem:[#allocation9 + $0x58] sm:$0xff] %v2779
          %2796 = vst [vmem:[#allocation9 + $0x60] sm:$0xff] %v2780
          %2797 = vst [vmem:[#allocation9 + $0x68] sm:$0xff] %v2781
          %2798 = vst [vmem:[#allocation9 + $0x70] sm:$0xff] %v2782
          %2799 = vst [vmem:[#allocation9 + $0x78] sm:$0xff] %v2783
        $region56: #{tpu_custom_call.1} parent=35 // pred_fallthru
          _
        // Predicated region
        $region57: #{tpu_custom_call.1} parent=35 // pred_check
          %p2800 = pneg %p129
        $region58: #{tpu_custom_call.1} parent=35 // pred_check_branch
          %2802 = sbr.rel (%p2800) target = $region60
        $region59: #{tpu_custom_call.1} parent=35 // pred_region
          %2804 = vsyncadd [#allocation5], 0
          %s2805 = sshll.u32 [#allocation9], 4
          %s2806 = int_to_ptr.vmem [resolvable:$true] %s2805
          %s2807 = sshll.u32 %s4, 4
          %s2808 = int_to_ptr.hbm [resolvable:$true] %s2807
          %2813 = dma.vmem_to_hbm [thread:$0]  %s2806, 2048, %s2808, [#allocation5], 128, 128, 8
        $region60: #{tpu_custom_call.1} parent=35 // pred_fallthru
          _
        // Predicated region
        $region61: #{tpu_custom_call.1} parent=35 // pred_check
          %p2814 = pneg %p129
        $region62: #{tpu_custom_call.1} parent=35 // pred_check_branch
          %2816 = sbr.rel (%p2814) target = $region64
        $region63: #{tpu_custom_call.1} parent=35 // pred_region
          %2818 = dma.done [#allocation5], 2048
        $region64: #{tpu_custom_call.1} parent=35 // pred_fallthru
          _
      $region36: #{tpu_custom_call.1} parent=5 // pred_fallthru
        _
      %p2819 = scmp.le.s32.totalorder 2, %s17
      // Predicated region
      $region65: #{tpu_custom_call.1} parent=5 // pred_check
        %p2820 = pneg %p2819
      $region66: #{tpu_custom_call.1} parent=5 // pred_check_branch
        %2822 = sbr.rel (%p2820) target = $region68
      $region67: #{tpu_custom_call.1} parent=5 // pred_region
        %s2823 = ssub.s32 %s17, 2
      $region68: #{tpu_custom_call.1} parent=5 // pred_fallthru
        _
    $region6: #{tpu_custom_call.1} parent=1 // loop_footer
      %s21 = sadd.s32 1, %s17
    $region7: #{tpu_custom_call.1} parent=1 // loop_footer_branch
      %16 = sbr.rel target = $region3
    $region8: #{tpu_custom_call.1} parent=1 // loop_exit
      _
    %2824 = vsyncpa [#allocation4], 1
    %s2825 = scalar_lea.sflag [#allocation4], 1
    %2826 = vsyncpa %s2825, 1
    %2827 = vsyncpa [#allocation7], 1
    %s2828 = scalar_lea.sflag [#allocation7], 1
    %2829 = vsyncpa %s2828, 1
    %2830 = vsyncpa [#allocation5], 1
    %s2831 = scalar_lea.sflag [#allocation5], 1
    %2832 = vsyncpa %s2831, 1

</llo_original>
